<compile_context>
chip_gen: v7x
topology: tpu7x:2x2x1
jax: 0.10.0
libtpu: 0.0.40
codegen_flags: <defaults>
</compile_context>

<pallas_src>
import jax
import jax.numpy as jnp
from jax.experimental import pallas as pl
from jax.experimental.pallas import tpu as pltpu

K = 7
CIN = 3
COUT = 32
H = W = 32
OH = OW = H - K + 1          # 26
PH = PW = OH // 2            # 13
FC_IN = COUT * PH * PW       # 5408
FC_OUT = 10
KSQ = CIN * K * K            # 147
NPIX = OH * OW               # 676
# last pool-window anchor sits at lane 2*(PH-1)*OW + 2*(PW-1) = 648
POOL_SPAN = 2 * (PH - 1) * OW + 2 * (PW - 1) + 1   # 649
NGRP = FC_OUT * COUT         # 320 fused (class, channel) index


# ---------------- fused Pallas kernel (one grid step per batch element) -------

def fused_cnn_kernel(p_ref, wc_ref, bc_ref, wsel_ref, bfc_ref, mask_ref,
                     gsum_ref, o_ref):
    # ---- conv + bias: one lane-dense MXU matmul -> (COUT, 676) ----
    conv = jnp.dot(wc_ref[...], p_ref[...],
                   preferred_element_type=jnp.float32) + bc_ref[...]

    # ---- 2x2 / stride-2 max pool (+ relu, which commutes with max) ----
    # window max at every anchor lane f: taps at f, f+1, f+OW, f+OW+1
    t00 = conv[:, 0:POOL_SPAN]
    t01 = conv[:, 1:POOL_SPAN + 1]
    t10 = conv[:, OW:OW + POOL_SPAN]
    t11 = conv[:, OW + 1:OW + 1 + POOL_SPAN]
    pooled = jnp.maximum(jnp.maximum(t00, t01), jnp.maximum(t10, t11))
    pooled = jnp.maximum(pooled, 0.0)                      # (COUT, 649)

    # ---- fc with pool-anchor selection folded into wsel (no reshapes) ----
    # t2[c, o*COUT + c'] = sum_f pooled[c, f] * wsel[f, o*COUT + c']
    t2 = jnp.dot(pooled, wsel_ref[...],
                 preferred_element_type=jnp.float32)       # (COUT, 320)
    # keep only the c == c' diagonal, then sum the lane-group of each class o
    per_c = jnp.dot(t2 * mask_ref[...], gsum_ref[...],
                    preferred_element_type=jnp.float32)    # (COUT, 10)
    logits = jnp.sum(per_c, axis=0, keepdims=True) + bfc_ref[...]   # (1, 10)

    # ---- softmax ----
    m = jnp.max(logits, axis=-1, keepdims=True)
    e = jnp.exp(logits - m)
    o_ref[...] = e / jnp.sum(e, axis=-1, keepdims=True)


# ---------------- one-time (hoisted) parameter preparation --------------------

def prepare_params(conv_w, conv_b, fc_w, fc_b):
    """Constant weight re-layouts, done ONCE outside the forward path."""
    wc = conv_w.reshape(COUT, KSQ).astype(jnp.float32)          # (32, 147)
    bc = conv_b.reshape(COUT, 1).astype(jnp.float32)            # (32, 1)

    # Expanded fc weight fused with the pool-anchor selection:
    #   wsel[f, o*COUT + c] = fc_w[o, c*PH*PW + ph*PW + pw]  if f == 2*ph*OW + 2*pw
    #                         0                              otherwise
    w4 = fc_w.reshape(FC_OUT, COUT, PH, PW).astype(jnp.float32)
    vals = w4.transpose(2, 3, 0, 1).reshape(PH * PW, NGRP)      # [(ph,pw), (o,c)]
    ph = jnp.arange(PH)
    pw = jnp.arange(PW)
    f_idx = (2 * ph[:, None] * OW + 2 * pw[None, :]).reshape(-1)  # (169,)
    wsel = jnp.zeros((POOL_SPAN, NGRP), jnp.float32).at[f_idx].set(vals)

    bfc = fc_b.reshape(1, FC_OUT).astype(jnp.float32)

    # diagonal (channel) mask and per-class one-hot group-sum matrix
    r = jnp.arange(NGRP)
    mask = (r[None, :] % COUT == jnp.arange(COUT)[:, None]).astype(jnp.float32)     # (32, 320)
    gsum = (r[:, None] // COUT == jnp.arange(FC_OUT)[None, :]).astype(jnp.float32)  # (320, 10)
    return wc, bc, wsel, bfc, mask, gsum


# ---------------- forward wrapper ---------------------------------------------

def im2col(x):
    # x: (B, CIN, H, W) -> (B, CIN*K*K, OH*OW); rows ordered (c, kh, kw),
    # columns ordered (oh, ow).  One fused XLA op, lane-dense output.
    B = x.shape[0]
    parts = []
    for kh in range(K):
        for kw in range(K):
            parts.append(x[:, :, kh:kh + OH, kw:kw + OW])   # (B, CIN, OH, OW)
    p = jnp.stack(parts, axis=2)                            # (B, CIN, K*K, OH, OW)
    return p.reshape(B, KSQ, NPIX)


@jax.jit
def vanilla_cnn_forward(x, wc, bc, wsel, bfc, mask, gsum):
    B = x.shape[0]
    patches = im2col(x.astype(jnp.float32))                 # (B, 147, 676)
    out = pl.pallas_call(
        fused_cnn_kernel,
        out_shape=jax.ShapeDtypeStruct((B, 1, FC_OUT), jnp.float32),
        grid=(B,),
        in_specs=[
            pl.BlockSpec((None, KSQ, NPIX), lambda b: (b, 0, 0)),   # patches
            pl.BlockSpec((COUT, KSQ), lambda b: (0, 0)),            # conv weight
            pl.BlockSpec((COUT, 1), lambda b: (0, 0)),              # conv bias
            pl.BlockSpec((POOL_SPAN, NGRP), lambda b: (0, 0)),      # fused fc weight
            pl.BlockSpec((1, FC_OUT), lambda b: (0, 0)),            # fc bias
            pl.BlockSpec((COUT, NGRP), lambda b: (0, 0)),           # diag mask
            pl.BlockSpec((NGRP, FC_OUT), lambda b: (0, 0)),         # group-sum
        ],
        out_specs=pl.BlockSpec((None, 1, FC_OUT), lambda b: (b, 0, 0)),
        compiler_params=pltpu.CompilerParams(
            dimension_semantics=("parallel",)),
    )(patches, wc, bc, wsel, bfc, mask, gsum)
    return out.reshape(B, FC_OUT)


# ---------------- pure-JAX reference (verification only) ----------------------

def reference_forward(x, conv_w, conv_b, fc_w, fc_b):
    B = x.shape[0]
    y = jax.lax.conv_general_dilated(
        x, conv_w, window_strides=(1, 1), padding="VALID",
        dimension_numbers=("NCHW", "OIHW", "NCHW"))
    y = jnp.maximum(y + conv_b.reshape(1, COUT, 1, 1), 0.0)
    y = y.reshape(B, COUT, PH, 2, PW, 2).max(axis=(3, 5))   # maxpool 2x2/2
    flat = y.reshape(B, FC_IN)                              # CHW flatten (PyTorch)
    logits = flat @ fc_w.T + fc_b
    return jax.nn.softmax(logits, axis=-1)


if __name__ == "__main__":
    key = jax.random.PRNGKey(0)
    kx, k1, k2, k3, k4 = jax.random.split(key, 5)
    x = jax.random.normal(kx, (2, CIN, H, W), jnp.float32)
    # deterministic synthetic parameters (shapes from VanillaCNN.__init__)
    conv_w = jax.random.normal(k1, (COUT, CIN, K, K), jnp.float32) * 0.05
    conv_b = jax.random.normal(k2, (COUT,), jnp.float32) * 0.05
    fc_w = jax.random.normal(k3, (FC_OUT, FC_IN), jnp.float32) * 0.02
    fc_b = jax.random.normal(k4, (FC_OUT,), jnp.float32) * 0.02

    params = prepare_params(conv_w, conv_b, fc_w, fc_b)     # hoisted, runs once

    out = jax.block_until_ready(vanilla_cnn_forward(x, *params))
    ref = jax.block_until_ready(reference_forward(x, conv_w, conv_b, fc_w, fc_b))

    assert out.shape == (2, FC_OUT), out.shape
    assert bool(jnp.allclose(jnp.sum(out, axis=-1), 1.0, atol=1e-4))
    assert bool(jnp.allclose(out, ref, atol=2e-4, rtol=2e-4))
    print("KERNEL_OK")
</pallas_src>

<mosaic_0001>
module attributes {stable_mosaic.version = 11 : i64} {
  func.func @fused_cnn_kernel(%arg0: i32, %arg1: memref<1x147x676xf32, #tpu.memory_space<vmem>>, %arg2: memref<32x147xf32, #tpu.memory_space<vmem>>, %arg3: memref<32x1xf32, #tpu.memory_space<vmem>>, %arg4: memref<649x320xf32, #tpu.memory_space<vmem>>, %arg5: memref<1x10xf32, #tpu.memory_space<vmem>>, %arg6: memref<32x320xf32, #tpu.memory_space<vmem>>, %arg7: memref<320x10xf32, #tpu.memory_space<vmem>>, %arg8: memref<1x1x10xf32, #tpu.memory_space<vmem>>) attributes {dimension_semantics = [#tpu.dimension_semantics<parallel>], iteration_bounds = array<i64: 2>, scalar_prefetch = 0 : i64, scratch_operands = 0 : i64, tpu.core_type = #tpu.core_type<tc>, window_params = [{transform_indices = @transform_0, window_bounds = array<i64: 1, 147, 676>}, {pipeline_mode = #tpu.pipeline_mode<synchronous>, transform_indices = @transform_1, window_bounds = array<i64: 32, 147>}, {pipeline_mode = #tpu.pipeline_mode<synchronous>, transform_indices = @transform_2, window_bounds = array<i64: 32, 1>}, {pipeline_mode = #tpu.pipeline_mode<synchronous>, transform_indices = @transform_3, window_bounds = array<i64: 649, 320>}, {pipeline_mode = #tpu.pipeline_mode<synchronous>, transform_indices = @transform_4, window_bounds = array<i64: 1, 10>}, {pipeline_mode = #tpu.pipeline_mode<synchronous>, transform_indices = @transform_5, window_bounds = array<i64: 32, 320>}, {pipeline_mode = #tpu.pipeline_mode<synchronous>, transform_indices = @transform_6, window_bounds = array<i64: 320, 10>}, {transform_indices = @transform_7, window_bounds = array<i64: 1, 1, 10>}]} {
    %c0 = arith.constant 0 : index
    %c0_0 = arith.constant 0 : index
    %0 = vector.load %arg2[%c0, %c0_0] : memref<32x147xf32, #tpu.memory_space<vmem>>, vector<32x147xf32>
    %c0_1 = arith.constant 0 : index
    %c0_2 = arith.constant 0 : index
    %c0_3 = arith.constant 0 : index
    %1 = vector.load %arg1[%c0_1, %c0_2, %c0_3] : memref<1x147x676xf32, #tpu.memory_space<vmem>>, vector<1x147x676xf32>
    %2 = vector.shape_cast %1 : vector<1x147x676xf32> to vector<147x676xf32>
    %cst = arith.constant dense<0.000000e+00> : vector<32x676xf32>
    %3 = tpu.matmul %0, %2, %cst {dimension_numbers = #tpu.dot_dimension_numbers<[1], [0], [0], [1], [0, 0, 1, 1], [], []>} : vector<32x147xf32>, vector<147x676xf32>, vector<32x676xf32> -> vector<32x676xf32>
    %c0_4 = arith.constant 0 : index
    %c0_5 = arith.constant 0 : index
    %4 = vector.load %arg3[%c0_4, %c0_5] : memref<32x1xf32, #tpu.memory_space<vmem>>, vector<32x1xf32>
    %5 = vector.broadcast %4 : vector<32x1xf32> to vector<32x676xf32>
    %6 = arith.addf %3, %5 : vector<32x676xf32>
    %7 = vector.extract_strided_slice %6 {offsets = [0, 0], sizes = [32, 649], strides = [1, 1]} : vector<32x676xf32> to vector<32x649xf32>
    %8 = vector.extract_strided_slice %6 {offsets = [0, 1], sizes = [32, 649], strides = [1, 1]} : vector<32x676xf32> to vector<32x649xf32>
    %9 = vector.extract_strided_slice %6 {offsets = [0, 26], sizes = [32, 649], strides = [1, 1]} : vector<32x676xf32> to vector<32x649xf32>
    %10 = vector.extract_strided_slice %6 {offsets = [0, 27], sizes = [32, 649], strides = [1, 1]} : vector<32x676xf32> to vector<32x649xf32>
    %11 = arith.maximumf %7, %8 : vector<32x649xf32>
    %12 = arith.maximumf %9, %10 : vector<32x649xf32>
    %13 = arith.maximumf %11, %12 : vector<32x649xf32>
    %cst_6 = arith.constant 0.000000e+00 : f32
    %14 = vector.broadcast %cst_6 : f32 to vector<32x649xf32>
    %15 = arith.maximumf %13, %14 : vector<32x649xf32>
    %c0_7 = arith.constant 0 : index
    %c0_8 = arith.constant 0 : index
    %16 = vector.load %arg4[%c0_7, %c0_8] : memref<649x320xf32, #tpu.memory_space<vmem>>, vector<649x320xf32>
    %cst_9 = arith.constant dense<0.000000e+00> : vector<32x320xf32>
    %17 = tpu.matmul %15, %16, %cst_9 {dimension_numbers = #tpu.dot_dimension_numbers<[1], [0], [0], [1], [0, 0, 1, 1], [], []>} : vector<32x649xf32>, vector<649x320xf32>, vector<32x320xf32> -> vector<32x320xf32>
    %c0_10 = arith.constant 0 : index
    %c0_11 = arith.constant 0 : index
    %18 = vector.load %arg6[%c0_10, %c0_11] : memref<32x320xf32, #tpu.memory_space<vmem>>, vector<32x320xf32>
    %19 = arith.mulf %17, %18 : vector<32x320xf32>
    %c0_12 = arith.constant 0 : index
    %c0_13 = arith.constant 0 : index
    %20 = vector.load %arg7[%c0_12, %c0_13] : memref<320x10xf32, #tpu.memory_space<vmem>>, vector<320x10xf32>
    %cst_14 = arith.constant dense<0.000000e+00> : vector<32x10xf32>
    %21 = tpu.matmul %19, %20, %cst_14 {dimension_numbers = #tpu.dot_dimension_numbers<[1], [0], [0], [1], [0, 0, 1, 1], [], []>} : vector<32x320xf32>, vector<320x10xf32>, vector<32x10xf32> -> vector<32x10xf32>
    %cst_15 = arith.constant dense<0.000000e+00> : vector<10xf32>
    %22 = vector.multi_reduction <add>, %21, %cst_15 [0] : vector<32x10xf32> to vector<10xf32>
    %23 = vector.shape_cast %22 : vector<10xf32> to vector<1x10xf32>
    %c0_16 = arith.constant 0 : index
    %c0_17 = arith.constant 0 : index
    %24 = vector.load %arg5[%c0_16, %c0_17] : memref<1x10xf32, #tpu.memory_space<vmem>>, vector<1x10xf32>
    %25 = arith.addf %23, %24 : vector<1x10xf32>
    %cst_18 = arith.constant dense<0xFF800000> : vector<1xf32>
    %26 = vector.multi_reduction <maximumf>, %25, %cst_18 [1] : vector<1x10xf32> to vector<1xf32>
    %27 = vector.shape_cast %26 : vector<1xf32> to vector<1x1xf32>
    %28 = vector.broadcast %27 : vector<1x1xf32> to vector<1x10xf32>
    %29 = arith.subf %25, %28 : vector<1x10xf32>
    %30 = math.exp %29 : vector<1x10xf32>
    %cst_19 = arith.constant dense<0.000000e+00> : vector<1xf32>
    %31 = vector.multi_reduction <add>, %30, %cst_19 [1] : vector<1x10xf32> to vector<1xf32>
    %32 = vector.shape_cast %31 : vector<1xf32> to vector<1x1xf32>
    %33 = vector.broadcast %32 : vector<1x1xf32> to vector<1x10xf32>
    %34 = arith.divf %30, %33 : vector<1x10xf32>
    %c0_20 = arith.constant 0 : index
    %c0_21 = arith.constant 0 : index
    %c0_22 = arith.constant 0 : index
    %35 = vector.load %arg8[%c0_20, %c0_21, %c0_22] : memref<1x1x10xf32, #tpu.memory_space<vmem>>, vector<1x1x10xf32>
    %36 = vector.shape_cast %35 : vector<1x1x10xf32> to vector<1x10xf32>
    %37 = vector.shape_cast %34 : vector<1x10xf32> to vector<1x1x10xf32>
    tpu.vector_store %arg8[%c0_20, %c0_21, %c0_22], %37 {strides = array<i32>} : memref<1x1x10xf32, #tpu.memory_space<vmem>>, vector<1x1x10xf32>,
    return
  }
  func.func @transform_0(%arg0: i32) -> (i32, i32, i32) {
    %c0_i32 = arith.constant 0 : i32
    %c0_i32_0 = arith.constant 0 : i32
    %c0_i32_1 = arith.constant 0 : i32
    return %arg0, %c0_i32, %c0_i32_0 : i32, i32, i32
  }
  func.func @transform_1(%arg0: i32) -> (i32, i32) {
    %c0_i32 = arith.constant 0 : i32
    %c0_i32_0 = arith.constant 0 : i32
    %c0_i32_1 = arith.constant 0 : i32
    return %c0_i32, %c0_i32_0 : i32, i32
  }
  func.func @transform_2(%arg0: i32) -> (i32, i32) {
    %c0_i32 = arith.constant 0 : i32
    %c0_i32_0 = arith.constant 0 : i32
    %c0_i32_1 = arith.constant 0 : i32
    return %c0_i32, %c0_i32_0 : i32, i32
  }
  func.func @transform_3(%arg0: i32) -> (i32, i32) {
    %c0_i32 = arith.constant 0 : i32
    %c0_i32_0 = arith.constant 0 : i32
    %c0_i32_1 = arith.constant 0 : i32
    return %c0_i32, %c0_i32_0 : i32, i32
  }
  func.func @transform_4(%arg0: i32) -> (i32, i32) {
    %c0_i32 = arith.constant 0 : i32
    %c0_i32_0 = arith.constant 0 : i32
    %c0_i32_1 = arith.constant 0 : i32
    return %c0_i32, %c0_i32_0 : i32, i32
  }
  func.func @transform_5(%arg0: i32) -> (i32, i32) {
    %c0_i32 = arith.constant 0 : i32
    %c0_i32_0 = arith.constant 0 : i32
    %c0_i32_1 = arith.constant 0 : i32
    return %c0_i32, %c0_i32_0 : i32, i32
  }
  func.func @transform_6(%arg0: i32) -> (i32, i32) {
    %c0_i32 = arith.constant 0 : i32
    %c0_i32_0 = arith.constant 0 : i32
    %c0_i32_1 = arith.constant 0 : i32
    return %c0_i32, %c0_i32_0 : i32, i32
  }
  func.func @transform_7(%arg0: i32) -> (i32, i32, i32) {
    %c0_i32 = arith.constant 0 : i32
    %c0_i32_0 = arith.constant 0 : i32
    %c0_i32_1 = arith.constant 0 : i32
    return %arg0, %c0_i32, %c0_i32_0 : i32, i32, i32
  }
}

</mosaic_0001>

<llo_original>
// kernel: vanilla_cnn_forward.1
$region0: #{vanilla_cnn_forward.1}
  #allocation0 [shape = 'u32[]', space=smem, size = 0x4, offset = 0x4, fixed_abs, tag = 'smem constant byte address 0x4 - core index']
  #allocation1 [shape = 'u32[144,128]{1,0:T(1,128)}', space=vmem, size = 0x12000, scoped, tag = 'internal scratch']
  %s0 = inlined_call_operand.vmem [shape: f32[2,147,676], index: 0, kind: input, shape index: {}]
  %s1 = inlined_call_operand.vmem [shape: f32[32,147], index: 1, kind: input, shape index: {}]
  %s2 = inlined_call_operand.vmem [shape: f32[32,1], index: 2, kind: input, shape index: {}]
  %s3 = inlined_call_operand.vmem [shape: f32[649,320], index: 3, kind: input, shape index: {}]
  %s4 = inlined_call_operand.vmem [shape: f32[1,10], index: 4, kind: input, shape index: {}]
  %s5 = inlined_call_operand.vmem [shape: f32[32,320], index: 5, kind: input, shape index: {}]
  %s6 = inlined_call_operand.vmem [shape: f32[320,10], index: 6, kind: input, shape index: {}]
  %s7 = inlined_call_operand.hbm [shape: f32[2,1,10], index: 7, kind: output, shape index: {}]
  %s8 = sld [smem:[#allocation0]]
  $region61: #{vanilla_cnn_forward.1} parent=0
    _
  %s10 = ssub.s32 1, %s8
  %s11 = scalar_select 0, %s10, %s8
  $region1: #{vanilla_cnn_forward.1} parent=0
    #allocation2 [shape = 'u8[1024]{0}', space=vmem, size = 0x400, scoped, tag = 'output window, operand 0']
    #allocation3 [shape = 's32[2]{0}', space=sflag, size = 0x8, scoped, tag = 'scoped memory for vanilla_cnn_forward.1']
    %12 = vsyncpa [#allocation3], 0
    %s13 = scalar_lea.sflag [#allocation3], 1
    %14 = vsyncpa %s13, 0
    loop: start=0, step=1, limit=4
    $region2: #{vanilla_cnn_forward.1} parent=1 // loop_pre_header
      _
    $region3: #{vanilla_cnn_forward.1} parent=1 // loop_header
      %s16 = sphi 0, %s20
      %p17 = scmp.ge.s32.totalorder %s16, 4
      %s26 = sphi 0, %s28
      %s29 = sphi 0, %s26
      %s30 = sphi 0, %s29
      %s46 = sphi 0, %s30
      %s50 = sphi 0, %s50
      %s52 = sphi 0, %s50
      %s53 = sphi 0, %s52
      %s67 = sphi 0, %s53
      %s71 = sphi 0, %s71
      %s73 = sphi 0, %s71
      %s74 = sphi 0, %s73
      %s88 = sphi 0, %s74
      %s92 = sphi 0, %s92
      %s94 = sphi 0, %s92
      %s95 = sphi 0, %s94
      %s109 = sphi 0, %s95
      %s113 = sphi 0, %s113
      %s115 = sphi 0, %s113
      %s116 = sphi 0, %s115
      %s130 = sphi 0, %s116
      %s134 = sphi 0, %s134
      %s136 = sphi 0, %s134
      %s137 = sphi 0, %s136
      %s151 = sphi 0, %s137
      %s155 = sphi 0, %s155
      %s157 = sphi 0, %s155
      %s158 = sphi 0, %s157
      %s172 = sphi 0, %s158
      %s178 = sphi 0, %s180
      %s181 = sphi 0, %s178
      %s182 = sphi 0, %s181
      %s198 = sphi 0, %s182
    $region4: #{vanilla_cnn_forward.1} parent=1 // loop_header_branch
      %19 = sbr.rel (%p17) target = $region8
    $region5: #{vanilla_cnn_forward.1} parent=1 // loop_body
      %s21 = ssub.s32 %s16, 1
      %s22 = ssub.s32 %s16, 2
      %s23 = sadd.s32 %s16, 1
      %s24 = ssub.s32 %s16, %s23
      %p25 = scmp.eq.s32.totalorder %s24, 0
      %s27 = sadd.s32 %s26, 1
      %s28 = scalar_select %p25, %s26, %s27
      %p31 = pneg %p25
      %p32 = scmp.eq.s32.totalorder %s16, 1
      %p33 = por %p31, %p32
      %p34 = scmp.ne.s32.totalorder %s26, %s29
      %p35 = scmp.eq.s32.totalorder %s16, 0
      %p36 = por %p34, %p35
      %p37 = scmp.ne.s32.totalorder %s26, %s29
      %p38 = scmp.eq.s32.totalorder %s21, 1
      %p39 = por %p37, %p38
      %p40 = scmp.ne.s32.totalorder %s29, %s30
      %p41 = scmp.eq.s32.totalorder %s21, 0
      %p42 = por %p40, %p41
      %p43 = scmp.ne.s32.totalorder %s29, %s30
      %p44 = scmp.eq.s32.totalorder %s22, 1
      %p45 = por %p43, %p44
      %p47 = scmp.ne.s32.totalorder %s30, %s46
      %p48 = scmp.eq.s32.totalorder %s22, 0
      %p49 = por %p47, %p48
      %s51 = sadd.s32 %s50, 1
      %p54 = scmp.eq.s32.totalorder %s16, 1
      %p55 = scmp.ne.s32.totalorder %s50, %s52
      %p56 = scmp.eq.s32.totalorder %s16, 0
      %p57 = por %p55, %p56
      %p58 = scmp.ne.s32.totalorder %s50, %s52
      %p59 = scmp.eq.s32.totalorder %s21, 1
      %p60 = por %p58, %p59
      %p61 = scmp.ne.s32.totalorder %s52, %s53
      %p62 = scmp.eq.s32.totalorder %s21, 0
      %p63 = por %p61, %p62
      %p64 = scmp.ne.s32.totalorder %s52, %s53
      %p65 = scmp.eq.s32.totalorder %s22, 1
      %p66 = por %p64, %p65
      %p68 = scmp.ne.s32.totalorder %s53, %s67
      %p69 = scmp.eq.s32.totalorder %s22, 0
      %p70 = por %p68, %p69
      %s72 = sadd.s32 %s71, 1
      %p75 = scmp.eq.s32.totalorder %s16, 1
      %p76 = scmp.ne.s32.totalorder %s71, %s73
      %p77 = scmp.eq.s32.totalorder %s16, 0
      %p78 = por %p76, %p77
      %p79 = scmp.ne.s32.totalorder %s71, %s73
      %p80 = scmp.eq.s32.totalorder %s21, 1
      %p81 = por %p79, %p80
      %p82 = scmp.ne.s32.totalorder %s73, %s74
      %p83 = scmp.eq.s32.totalorder %s21, 0
      %p84 = por %p82, %p83
      %p85 = scmp.ne.s32.totalorder %s73, %s74
      %p86 = scmp.eq.s32.totalorder %s22, 1
      %p87 = por %p85, %p86
      %p89 = scmp.ne.s32.totalorder %s74, %s88
      %p90 = scmp.eq.s32.totalorder %s22, 0
      %p91 = por %p89, %p90
      %s93 = sadd.s32 %s92, 1
      %p96 = scmp.eq.s32.totalorder %s16, 1
      %p97 = scmp.ne.s32.totalorder %s92, %s94
      %p98 = scmp.eq.s32.totalorder %s16, 0
      %p99 = por %p97, %p98
      %p100 = scmp.ne.s32.totalorder %s92, %s94
      %p101 = scmp.eq.s32.totalorder %s21, 1
      %p102 = por %p100, %p101
      %p103 = scmp.ne.s32.totalorder %s94, %s95
      %p104 = scmp.eq.s32.totalorder %s21, 0
      %p105 = por %p103, %p104
      %p106 = scmp.ne.s32.totalorder %s94, %s95
      %p107 = scmp.eq.s32.totalorder %s22, 1
      %p108 = por %p106, %p107
      %p110 = scmp.ne.s32.totalorder %s95, %s109
      %p111 = scmp.eq.s32.totalorder %s22, 0
      %p112 = por %p110, %p111
      %s114 = sadd.s32 %s113, 1
      %p117 = scmp.eq.s32.totalorder %s16, 1
      %p118 = scmp.ne.s32.totalorder %s113, %s115
      %p119 = scmp.eq.s32.totalorder %s16, 0
      %p120 = por %p118, %p119
      %p121 = scmp.ne.s32.totalorder %s113, %s115
      %p122 = scmp.eq.s32.totalorder %s21, 1
      %p123 = por %p121, %p122
      %p124 = scmp.ne.s32.totalorder %s115, %s116
      %p125 = scmp.eq.s32.totalorder %s21, 0
      %p126 = por %p124, %p125
      %p127 = scmp.ne.s32.totalorder %s115, %s116
      %p128 = scmp.eq.s32.totalorder %s22, 1
      %p129 = por %p127, %p128
      %p131 = scmp.ne.s32.totalorder %s116, %s130
      %p132 = scmp.eq.s32.totalorder %s22, 0
      %p133 = por %p131, %p132
      %s135 = sadd.s32 %s134, 1
      %p138 = scmp.eq.s32.totalorder %s16, 1
      %p139 = scmp.ne.s32.totalorder %s134, %s136
      %p140 = scmp.eq.s32.totalorder %s16, 0
      %p141 = por %p139, %p140
      %p142 = scmp.ne.s32.totalorder %s134, %s136
      %p143 = scmp.eq.s32.totalorder %s21, 1
      %p144 = por %p142, %p143
      %p145 = scmp.ne.s32.totalorder %s136, %s137
      %p146 = scmp.eq.s32.totalorder %s21, 0
      %p147 = por %p145, %p146
      %p148 = scmp.ne.s32.totalorder %s136, %s137
      %p149 = scmp.eq.s32.totalorder %s22, 1
      %p150 = por %p148, %p149
      %p152 = scmp.ne.s32.totalorder %s137, %s151
      %p153 = scmp.eq.s32.totalorder %s22, 0
      %p154 = por %p152, %p153
      %s156 = sadd.s32 %s155, 1
      %p159 = scmp.eq.s32.totalorder %s16, 1
      %p160 = scmp.ne.s32.totalorder %s155, %s157
      %p161 = scmp.eq.s32.totalorder %s16, 0
      %p162 = por %p160, %p161
      %p163 = scmp.ne.s32.totalorder %s155, %s157
      %p164 = scmp.eq.s32.totalorder %s21, 1
      %p165 = por %p163, %p164
      %p166 = scmp.ne.s32.totalorder %s157, %s158
      %p167 = scmp.eq.s32.totalorder %s21, 0
      %p168 = por %p166, %p167
      %p169 = scmp.ne.s32.totalorder %s157, %s158
      %p170 = scmp.eq.s32.totalorder %s22, 1
      %p171 = por %p169, %p170
      %p173 = scmp.ne.s32.totalorder %s158, %s172
      %p174 = scmp.eq.s32.totalorder %s22, 0
      %p175 = por %p173, %p174
      %s176 = ssub.s32 %s16, %s23
      %p177 = scmp.eq.s32.totalorder %s176, 0
      %s179 = sadd.s32 %s178, 1
      %s180 = scalar_select %p177, %s178, %s179
      %p183 = pneg %p177
      %p184 = scmp.eq.s32.totalorder %s16, 1
      %p185 = por %p183, %p184
      %p186 = scmp.ne.s32.totalorder %s178, %s181
      %p187 = scmp.eq.s32.totalorder %s16, 0
      %p188 = por %p186, %p187
      %p189 = scmp.ne.s32.totalorder %s178, %s181
      %p190 = scmp.eq.s32.totalorder %s21, 1
      %p191 = por %p189, %p190
      %p192 = scmp.ne.s32.totalorder %s181, %s182
      %p193 = scmp.eq.s32.totalorder %s21, 0
      %p194 = por %p192, %p193
      %p195 = scmp.ne.s32.totalorder %s181, %s182
      %p196 = scmp.eq.s32.totalorder %s22, 1
      %p197 = por %p195, %p196
      %p199 = scmp.ne.s32.totalorder %s182, %s198
      %p200 = scmp.eq.s32.totalorder %s22, 0
      %p201 = por %p199, %p200
      %p202 = scmp.le.s32.totalorder 1, %s16
      %p203 = scmp.lt.s32.totalorder %s16, 3
      %p204 = pnand %p202, %p203
      %p205 = pneg %p204
      // Predicated region
      $region9: #{vanilla_cnn_forward.1} parent=5 // pred_check
        _
      $region10: #{vanilla_cnn_forward.1} parent=5 // pred_check_branch
        %207 = sbr.rel (%p204) target = $region12
      $region11: #{vanilla_cnn_forward.1} parent=5 // pred_region
        %s208 = ssub.s32 %s16, 1
        // Predicated region
        $region13: #{vanilla_cnn_forward.1} parent=11 // pred_check
          %p209 = pneg %p63
        $region14: #{vanilla_cnn_forward.1} parent=11 // pred_check_branch
          %211 = sbr.rel (%p209) target = $region16
        $region15: #{vanilla_cnn_forward.1} parent=11 // pred_region
          _
        $region16: #{vanilla_cnn_forward.1} parent=11 // pred_fallthru
          _
        // Predicated region
        $region17: #{vanilla_cnn_forward.1} parent=11 // pred_check
          %p212 = pneg %p84
        $region18: #{vanilla_cnn_forward.1} parent=11 // pred_check_branch
          %214 = sbr.rel (%p212) target = $region20
        $region19: #{vanilla_cnn_forward.1} parent=11 // pred_region
          _
        $region20: #{vanilla_cnn_forward.1} parent=11 // pred_fallthru
          _
        // Predicated region
        $region21: #{vanilla_cnn_forward.1} parent=11 // pred_check
          %p215 = pneg %p105
        $region22: #{vanilla_cnn_forward.1} parent=11 // pred_check_branch
          %217 = sbr.rel (%p215) target = $region24
        $region23: #{vanilla_cnn_forward.1} parent=11 // pred_region
          _
        $region24: #{vanilla_cnn_forward.1} parent=11 // pred_fallthru
          _
        // Predicated region
        $region25: #{vanilla_cnn_forward.1} parent=11 // pred_check
          %p218 = pneg %p126
        $region26: #{vanilla_cnn_forward.1} parent=11 // pred_check_branch
          %220 = sbr.rel (%p218) target = $region28
        $region27: #{vanilla_cnn_forward.1} parent=11 // pred_region
          _
        $region28: #{vanilla_cnn_forward.1} parent=11 // pred_fallthru
          _
        // Predicated region
        $region29: #{vanilla_cnn_forward.1} parent=11 // pred_check
          %p221 = pneg %p147
        $region30: #{vanilla_cnn_forward.1} parent=11 // pred_check_branch
          %223 = sbr.rel (%p221) target = $region32
        $region31: #{vanilla_cnn_forward.1} parent=11 // pred_region
          _
        $region32: #{vanilla_cnn_forward.1} parent=11 // pred_fallthru
          _
        // Predicated region
        $region33: #{vanilla_cnn_forward.1} parent=11 // pred_check
          %p224 = pneg %p168
        $region34: #{vanilla_cnn_forward.1} parent=11 // pred_check_branch
          %226 = sbr.rel (%p224) target = $region36
        $region35: #{vanilla_cnn_forward.1} parent=11 // pred_region
          _
        $region36: #{vanilla_cnn_forward.1} parent=11 // pred_fallthru
          _
      $region12: #{vanilla_cnn_forward.1} parent=5 // pred_fallthru
        _
      %p227 = scmp.lt.s32.totalorder %s16, 2
      // Predicated region
      $region37: #{vanilla_cnn_forward.1} parent=5 // pred_check
        %p228 = pneg %p227
      $region38: #{vanilla_cnn_forward.1} parent=5 // pred_check_branch
        %230 = sbr.rel (%p228) target = $region40
      $region39: #{vanilla_cnn_forward.1} parent=5 // pred_region
        // Predicated region
        $region41: #{vanilla_cnn_forward.1} parent=39 // pred_check
          %p231 = pneg %p36
        $region42: #{vanilla_cnn_forward.1} parent=39 // pred_check_branch
          %233 = sbr.rel (%p231) target = $region44
        $region43: #{vanilla_cnn_forward.1} parent=39 // pred_region
          %p234 = scmp.lt.s32.totalorder %s16, 1
          %s235 = scalar_select %p234, %s16, 1
          %s236 = smul.addr %s235, 114
          %s237 = smul.addr %s236, 8
          %s238 = scalar_lea.vmem %s0, %s237
        $region44: #{vanilla_cnn_forward.1} parent=39 // pred_fallthru
          _
      $region40: #{vanilla_cnn_forward.1} parent=5 // pred_fallthru
        _
      %p239 = scmp.le.s32.totalorder 1, %s16
      %p240 = scmp.lt.s32.totalorder %s16, 3
      %p241 = pnand %p239, %p240
      %p242 = pneg %p241
      // Predicated region
      $region45: #{vanilla_cnn_forward.1} parent=5 // pred_check
        _
      $region46: #{vanilla_cnn_forward.1} parent=5 // pred_check_branch
        %244 = sbr.rel (%p241) target = $region48
      $region47: #{vanilla_cnn_forward.1} parent=5 // pred_region
        %s245 = ssub.s32 %s16, 1
        %p246 = scmp.lt.s32.totalorder %s21, 1
        %s247 = scalar_select %p246, %s21, 1
        %s248 = smul.addr %s247, 114
        %s249 = smul.addr %s248, 8
        %s250 = scalar_lea.vmem %s0, %s249
        %p251 = pneg %p42
        %p252 = pneg %p39
        %p253 = pneg %p63
        %p254 = pneg %p60
        %p255 = pneg %p84
        %p256 = pneg %p81
        %p257 = pneg %p105
        %p258 = pneg %p102
        %p259 = pneg %p126
        %p260 = pneg %p123
        %p261 = pneg %p147
        %p262 = pneg %p144
        %p263 = pneg %p168
        %p264 = pneg %p165
        %p265 = pneg %p194
        %p266 = pneg %p191
        %s267 = sand.u32 %s181, 1
        %s268 = scalar_lea.sflag [#allocation3], %s267
        %s269 = sand.u32 %s181, 1
        %s270 = scalar_lea.vmem [#allocation2], %s269
        %p271 = scmp.lt.s32.totalorder %s21, 1
        %s272 = scalar_select %p271, %s21, 1
        %s273 = smul.addr %s272, 114
        %s274 = smul.addr %s273, 8
        %s275 = scalar_lea.vmem %s0, %s274
        %v276 = vld [vmem:[%s1] sm:$0xff]
        %v277 = vld [vmem:[%s1 + $0x8] sm:$0xff]
        %v278 = vld [vmem:[%s1 + $0x10] sm:$0xff]
        %v279 = vld [vmem:[%s1 + $0x18] sm:$0xff]
        %v280 = vld [vmem:[%s1 + $0x20] sm:$0xff]
        %v281 = vld [vmem:[%s1 + $0x28] sm:$0xff]
        %v282 = vld [vmem:[%s1 + $0x30] sm:$0xff]
        %v283 = vld [vmem:[%s1 + $0x38] sm:$0xff]
        %v284 = vld [vmem:[%s275] sm:$0xff]
        %v285 = vld [vmem:[%s275 + $0x8] sm:$0xff]
        %v286 = vld [vmem:[%s275 + $0x10] sm:$0xff]
        %v287 = vld [vmem:[%s275 + $0x18] sm:$0xff]
        %v288 = vld [vmem:[%s275 + $0x20] sm:$0xff]
        %v289 = vld [vmem:[%s275 + $0x28] sm:$0xff]
        %v290 = vld [vmem:[%s275 + $0x30] sm:$0xff]
        %v291 = vld [vmem:[%s275 + $0x38] sm:$0xff]
        %v292 = vld [vmem:[%s275 + $0x40] sm:$0xff]
        %v293 = vld [vmem:[%s275 + $0x48] sm:$0xff]
        %v294 = vld [vmem:[%s275 + $0x50] sm:$0xff]
        %v295 = vld [vmem:[%s275 + $0x58] sm:$0xff]
        %v296 = vld [vmem:[%s275 + $0x60] sm:$0xff]
        %v297 = vld [vmem:[%s275 + $0x68] sm:$0xff]
        %v298 = vld [vmem:[%s275 + $0x70] sm:$0xff]
        %v299 = vld [vmem:[%s275 + $0x78] sm:$0xff]
        %v300 = vld [vmem:[%s275 + $0x80] sm:$0xff]
        %v301 = vld [vmem:[%s275 + $0x88] sm:$0xff]
        %v302 = vld [vmem:[%s275 + $0x90] sm:$0xff]
        %v303 = vld [vmem:[%s275 + $0x98] sm:$0xff]
        %v304 = vld [vmem:[%s275 + $0xa0] sm:$0xff]
        %v305 = vld [vmem:[%s275 + $0xa8] sm:$0xff]
        %v306 = vld [vmem:[%s275 + $0xb0] sm:$0xff]
        %v307 = vld [vmem:[%s275 + $0xb8] sm:$0xff]
        %v308 = vld [vmem:[%s275 + $0xc0] sm:$0xff]
        %v309 = vld [vmem:[%s275 + $0xc8] sm:$0xff]
        %v310 = vld [vmem:[%s275 + $0xd0] sm:$0xff]
        %v311 = vld [vmem:[%s275 + $0xd8] sm:$0xff]
        %v312 = vld [vmem:[%s275 + $0xe0] sm:$0xff]
        %v313 = vld [vmem:[%s275 + $0xe8] sm:$0xff]
        %v314 = vld [vmem:[%s275 + $0xf0] sm:$0xff]
        %v315 = vld [vmem:[%s275 + $0xf8] sm:$0xff]
        %v316 = vld [vmem:[%s275 + $0x100] sm:$0xff]
        %v317 = vld [vmem:[%s275 + $0x108] sm:$0xff]
        %v318 = vld [vmem:[%s275 + $0x110] sm:$0xff]
        %v319 = vld [vmem:[%s275 + $0x118] sm:$0xff]
        %v320 = vld [vmem:[%s275 + $0x120] sm:$0xff]
        %v321 = vld [vmem:[%s275 + $0x128] sm:$0xff]
        %v322 = vld [vmem:[%s275 + $0x130] sm:$0xff]
        %v323 = vld [vmem:[%s275 + $0x138] sm:$0xff]
        %v324 = vld [vmem:[%s275 + $0x140] sm:$0xff]
        %v325 = vld [vmem:[%s275 + $0x148] sm:$0xff]
        %v326 = vld [vmem:[%s275 + $0x150] sm:$0xff]
        %v327 = vld [vmem:[%s275 + $0x158] sm:$0xff]
        %v328 = vld [vmem:[%s275 + $0x160] sm:$0xff]
        %v329 = vld [vmem:[%s275 + $0x168] sm:$0xff]
        %v330 = vld [vmem:[%s275 + $0x170] sm:$0xff]
        %v331 = vld [vmem:[%s275 + $0x178] sm:$0xff]
        %v332 = vld [vmem:[%s275 + $0x180] sm:$0xff]
        %v333 = vld [vmem:[%s275 + $0x188] sm:$0xff]
        %v334 = vld [vmem:[%s275 + $0x190] sm:$0xff]
        %v335 = vld [vmem:[%s275 + $0x198] sm:$0xff]
        %v336 = vld [vmem:[%s275 + $0x1a0] sm:$0xff]
        %v337 = vld [vmem:[%s275 + $0x1a8] sm:$0xff]
        %v338 = vld [vmem:[%s275 + $0x1b0] sm:$0xff]
        %v339 = vld [vmem:[%s275 + $0x1b8] sm:$0xff]
        %v340 = vld [vmem:[%s275 + $0x1c0] sm:$0xff]
        %v341 = vld [vmem:[%s275 + $0x1c8] sm:$0xff]
        %v342 = vld [vmem:[%s275 + $0x1d0] sm:$0xff]
        %v343 = vld [vmem:[%s275 + $0x1d8] sm:$0xff]
        %v344 = vld [vmem:[%s275 + $0x1e0] sm:$0xff]
        %v345 = vld [vmem:[%s275 + $0x1e8] sm:$0xff]
        %v346 = vld [vmem:[%s275 + $0x1f0] sm:$0xff]
        %v347 = vld [vmem:[%s275 + $0x1f8] sm:$0xff]
        %v348 = vld [vmem:[%s275 + $0x200] sm:$0xff]
        %v349 = vld [vmem:[%s275 + $0x208] sm:$0xff]
        %v350 = vld [vmem:[%s275 + $0x210] sm:$0xff]
        %v351 = vld [vmem:[%s275 + $0x218] sm:$0xff]
        %v352 = vld [vmem:[%s275 + $0x220] sm:$0xff]
        %v353 = vld [vmem:[%s275 + $0x228] sm:$0xff]
        %v354 = vld [vmem:[%s275 + $0x230] sm:$0xff]
        %v355 = vld [vmem:[%s275 + $0x238] sm:$0xff]
        %v356 = vld [vmem:[%s275 + $0x240] sm:$0xff]
        %v357 = vld [vmem:[%s275 + $0x248] sm:$0xff]
        %v358 = vld [vmem:[%s275 + $0x250] sm:$0xff]
        %v359 = vld [vmem:[%s275 + $0x258] sm:$0xff]
        %v360 = vld [vmem:[%s275 + $0x260] sm:$0xff]
        %v361 = vld [vmem:[%s275 + $0x268] sm:$0xff]
        %v362 = vld [vmem:[%s275 + $0x270] sm:$0xff]
        %v363 = vld [vmem:[%s275 + $0x278] sm:$0xff]
        %v364 = vld [vmem:[%s275 + $0x280] sm:$0xff]
        %v365 = vld [vmem:[%s275 + $0x288] sm:$0xff]
        %v366 = vld [vmem:[%s275 + $0x290] sm:$0xff]
        %v367 = vld [vmem:[%s275 + $0x298] sm:$0xff]
        %v368 = vld [vmem:[%s275 + $0x2a0] sm:$0xff]
        %v369 = vld [vmem:[%s275 + $0x2a8] sm:$0xff]
        %v370 = vld [vmem:[%s275 + $0x2b0] sm:$0xff]
        %v371 = vld [vmem:[%s275 + $0x2b8] sm:$0xff]
        %v372 = vld [vmem:[%s275 + $0x2c0] sm:$0xff]
        %v373 = vld [vmem:[%s275 + $0x2c8] sm:$0xff]
        %v374 = vld [vmem:[%s275 + $0x2d0] sm:$0xff]
        %v375 = vld [vmem:[%s275 + $0x2d8] sm:$0xff]
        %v376 = vld [vmem:[%s275 + $0x2e0] sm:$0xff]
        %v377 = vld [vmem:[%s275 + $0x2e8] sm:$0xff]
        %v378 = vld [vmem:[%s275 + $0x2f0] sm:$0xff]
        %v379 = vld [vmem:[%s275 + $0x2f8] sm:$0xff]
        %v380 = vld [vmem:[%s275 + $0x300] sm:$0xff]
        %v381 = vld [vmem:[%s275 + $0x308] sm:$0xff]
        %v382 = vld [vmem:[%s275 + $0x310] sm:$0xff]
        %v383 = vld [vmem:[%s275 + $0x318] sm:$0xff]
        %v384 = vld [vmem:[%s275 + $0x320] sm:$0xff]
        %v385 = vld [vmem:[%s275 + $0x328] sm:$0xff]
        %v386 = vld [vmem:[%s275 + $0x330] sm:$0xff]
        %v387 = vld [vmem:[%s275 + $0x338] sm:$0xff]
        %v388 = vld [vmem:[%s275 + $0x340] sm:$0xff]
        %v389 = vld [vmem:[%s275 + $0x348] sm:$0xff]
        %v390 = vld [vmem:[%s275 + $0x350] sm:$0xff]
        %v391 = vld [vmem:[%s275 + $0x358] sm:$0xff]
        %v392 = vld [vmem:[%s275 + $0x360] sm:$0x7]
        %v393 = vld [vmem:[%s275 + $0x368] sm:$0x7]
        %v394 = vld [vmem:[%s275 + $0x370] sm:$0x7]
        %v395 = vld [vmem:[%s275 + $0x378] sm:$0x7]
        %v396 = vld [vmem:[%s275 + $0x380] sm:$0x7]
        %v397 = vld [vmem:[%s275 + $0x388] sm:$0x7]
        %v398 = vld [vmem:[%s2] sm:$0xff]
        %v399 = vld [vmem:[%s2 + $0x8] sm:$0xff]
        %v400 = vld [vmem:[%s2 + $0x10] sm:$0xff]
        %v401 = vld [vmem:[%s2 + $0x18] sm:$0xff]
        %403 = vset.pattern.permute.xlu0 0
        %404 = vperm.xlu0 %403, %v398
        %v405 = vpop.permute.xlu0 %404
        %408 = vset.pattern.permute.xlu0 0
        %409 = vperm.xlu0 %408, %v399
        %v410 = vpop.permute.xlu0 %409
        %413 = vset.pattern.permute.xlu0 0
        %414 = vperm.xlu0 %413, %v400
        %v415 = vpop.permute.xlu0 %414
        %418 = vset.pattern.permute.xlu0 0
        %419 = vperm.xlu0 %418, %v401
        %v420 = vpop.permute.xlu0 %419
        %vm422 = vcmask 154624
        %v424 = vsel %vm422, %v277, 0
        %v427 = vsel %vm422, %v279, 0
        %v430 = vsel %vm422, %v281, 0
        %v433 = vsel %vm422, %v283, 0
        %vm435 = vcmask 1042432
        %v437 = vsel %vm435, %v392, 0
        %v440 = vsel %vm435, %v393, 0
        %v443 = vsel %vm435, %v394, 0
        %v446 = vsel %vm435, %v395, 0
        %v449 = vsel %vm435, %v396, 0
        %v452 = vsel %vm435, %v397, 0
        %454 = vmatprep.subr.mxu0 %v285
        %455 = vmatpush1.msra.mxu0 %v284
        %456 = vmatprep.subr.mxu0 %v291
        %457 = vmatpush1.msra.mxu0 %v290
        %458 = vmatprep.subr.mxu0 %v297
        %459 = vmatpush1.msra.mxu0 %v296
        %460 = vmatprep.subr.mxu0 %v303
        %461 = vmatpush1.msra.mxu0 %v302
        %462 = vmatprep.subr.mxu0 %v309
        %463 = vmatpush1.msra.mxu0 %v308
        %464 = vmatprep.subr.mxu0 %v315
        %465 = vmatpush1.msra.mxu0 %v314
        %466 = vmatprep.subr.mxu0 %v321
        %467 = vmatpush1.msra.mxu0 %v320
        %468 = vmatprep.subr.mxu0 %v327
        %469 = vmatpush1.msra.mxu0 %v326
        %470 = vmatprep.subr.mxu0 %v333
        %471 = vmatpush1.msra.mxu0 %v332
        %472 = vmatprep.subr.mxu0 %v339
        %473 = vmatpush1.msra.mxu0 %v338
        %474 = vmatprep.subr.mxu0 %v345
        %475 = vmatpush1.msra.mxu0 %v344
        %476 = vmatprep.subr.mxu0 %v351
        %477 = vmatpush1.msra.mxu0 %v350
        %478 = vmatprep.subr.mxu0 %v357
        %479 = vmatpush1.msra.mxu0 %v356
        %480 = vmatprep.subr.mxu0 %v363
        %481 = vmatpush1.msra.mxu0 %v362
        %482 = vmatprep.subr.mxu0 %v369
        %483 = vmatpush1.msra.mxu0 %v368
        %484 = vmatprep.subr.mxu0 %v375
        %485 = vmatpush1.msra.mxu0 %v374
        %486 = vmatprep.subr.mxu0 %v381
        %487 = vmatpush1.msra.mxu0 %v380
        %488 = vmatprep.subr.mxu0 %v387
        %489 = vmatpush1.msra.mxu0 %v386
        %490 = vmatprep.subr.mxu0 %v440
        %491 = vmatpush1.msra.mxu0 %v437
        %492 = vmatprep.subr.mxu0 0.0
        %493 = vmatpush1.msra.mxu0 0.0
        %494 = vmatprep.subr.mxu0 0.0
        %495 = vmatpush1.msra.mxu0 0.0
        %496 = vmatprep.subr.mxu0 0.0
        %497 = vmatpush1.msra.mxu0 0.0
        %498 = vmatprep.subr.mxu0 0.0
        %499 = vmatpush1.msra.mxu0 0.0
        %500 = vmatprep.subr.mxu0 0.0
        %501 = vmatpush1.msra.mxu0 0.0
        %502 = vmatprep.subr.mxu0 0.0
        %503 = vmatpush1.msra.mxu0 0.0
        %504 = vmatprep.subr.mxu0 0.0
        %505 = vmatpush1.msra.mxu0 0.0
        %506 = vmatprep.subr.mxu0 0.0
        %507 = vmatpush1.msra.mxu0 0.0
        %508 = vmatprep.subr.mxu0 0.0
        %509 = vmatpush1.msra.mxu0 0.0
        %510 = vmatprep.subr.mxu0 0.0
        %511 = vmatpush1.msra.mxu0 0.0
        %512 = vmatprep.subr.mxu0 0.0
        %513 = vmatpush1.msra.mxu0 0.0
        %514 = vmatprep.subr.mxu0 0.0
        %515 = vmatpush1.msra.mxu0 0.0
        %516 = vmatprep.subr.mxu0 0.0
        %517 = vmatpush1.msra.mxu0 0.0
        %518 = vmatprep.mubr.f32.mxu0 %v424
        %519 = vmatmul.mubr.f32.gmra.mrb[0].mxu0 %v276
        %v520 = vpop.f32.mrb[0].mxu0
        %v521 = vadd.f32 %v405, %v520
        %v522 = vpop.f32.mrb[0].mxu0
        %v523 = vadd.f32 %v405, %v522
        %524 = vmatprep.mubr.f32.mxu0 %v427
        %525 = vmatmul.mubr.f32.gmra.mrb[0].mxu0 %v278
        %v526 = vpop.f32.mrb[0].mxu0
        %v527 = vadd.f32 %v410, %v526
        %v528 = vpop.f32.mrb[0].mxu0
        %v529 = vadd.f32 %v410, %v528
        %530 = vmatprep.mubr.f32.mxu0 %v430
        %531 = vmatmul.mubr.f32.gmra.mrb[0].mxu0 %v280
        %v532 = vpop.f32.mrb[0].mxu0
        %v533 = vadd.f32 %v415, %v532
        %v534 = vpop.f32.mrb[0].mxu0
        %v535 = vadd.f32 %v415, %v534
        %536 = vmatprep.mubr.f32.mxu0 %v433
        %537 = vmatmul.mubr.f32.gmra.mrb[0].mxu0 %v282
        %v538 = vpop.f32.mrb[0].mxu0
        %v539 = vadd.f32 %v420, %v538
        %v540 = vpop.f32.mrb[0].mxu0
        %v541 = vadd.f32 %v420, %v540
        %542 = vdwg.mxu0
        %543 = vmatprep.subr.mxu0 %v287
        %544 = vmatpush1.msra.mxu0 %v286
        %545 = vmatprep.subr.mxu0 %v293
        %546 = vmatpush1.msra.mxu0 %v292
        %547 = vmatprep.subr.mxu0 %v299
        %548 = vmatpush1.msra.mxu0 %v298
        %549 = vmatprep.subr.mxu0 %v305
        %550 = vmatpush1.msra.mxu0 %v304
        %551 = vmatprep.subr.mxu0 %v311
        %552 = vmatpush1.msra.mxu0 %v310
        %553 = vmatprep.subr.mxu0 %v317
        %554 = vmatpush1.msra.mxu0 %v316
        %555 = vmatprep.subr.mxu0 %v323
        %556 = vmatpush1.msra.mxu0 %v322
        %557 = vmatprep.subr.mxu0 %v329
        %558 = vmatpush1.msra.mxu0 %v328
        %559 = vmatprep.subr.mxu0 %v335
        %560 = vmatpush1.msra.mxu0 %v334
        %561 = vmatprep.subr.mxu0 %v341
        %562 = vmatpush1.msra.mxu0 %v340
        %563 = vmatprep.subr.mxu0 %v347
        %564 = vmatpush1.msra.mxu0 %v346
        %565 = vmatprep.subr.mxu0 %v353
        %566 = vmatpush1.msra.mxu0 %v352
        %567 = vmatprep.subr.mxu0 %v359
        %568 = vmatpush1.msra.mxu0 %v358
        %569 = vmatprep.subr.mxu0 %v365
        %570 = vmatpush1.msra.mxu0 %v364
        %571 = vmatprep.subr.mxu0 %v371
        %572 = vmatpush1.msra.mxu0 %v370
        %573 = vmatprep.subr.mxu0 %v377
        %574 = vmatpush1.msra.mxu0 %v376
        %575 = vmatprep.subr.mxu0 %v383
        %576 = vmatpush1.msra.mxu0 %v382
        %577 = vmatprep.subr.mxu0 %v389
        %578 = vmatpush1.msra.mxu0 %v388
        %579 = vmatprep.subr.mxu0 %v446
        %580 = vmatpush1.msra.mxu0 %v443
        %581 = vmatprep.subr.mxu0 0.0
        %582 = vmatpush1.msra.mxu0 0.0
        %583 = vmatprep.subr.mxu0 0.0
        %584 = vmatpush1.msra.mxu0 0.0
        %585 = vmatprep.subr.mxu0 0.0
        %586 = vmatpush1.msra.mxu0 0.0
        %587 = vmatprep.subr.mxu0 0.0
        %588 = vmatpush1.msra.mxu0 0.0
        %589 = vmatprep.subr.mxu0 0.0
        %590 = vmatpush1.msra.mxu0 0.0
        %591 = vmatprep.subr.mxu0 0.0
        %592 = vmatpush1.msra.mxu0 0.0
        %593 = vmatprep.subr.mxu0 0.0
        %594 = vmatpush1.msra.mxu0 0.0
        %595 = vmatprep.subr.mxu0 0.0
        %596 = vmatpush1.msra.mxu0 0.0
        %597 = vmatprep.subr.mxu0 0.0
        %598 = vmatpush1.msra.mxu0 0.0
        %599 = vmatprep.subr.mxu0 0.0
        %600 = vmatpush1.msra.mxu0 0.0
        %601 = vmatprep.subr.mxu0 0.0
        %602 = vmatpush1.msra.mxu0 0.0
        %603 = vmatprep.subr.mxu0 0.0
        %604 = vmatpush1.msra.mxu0 0.0
        %605 = vmatprep.subr.mxu0 0.0
        %606 = vmatpush1.msra.mxu0 0.0
        %607 = vmatprep.mubr.f32.mxu0 %v424
        %608 = vmatmul.mubr.f32.gmra.mrb[0].mxu0 %v276
        %v609 = vpop.f32.mrb[0].mxu0
        %v610 = vadd.f32 %v405, %v609
        %v611 = vpop.f32.mrb[0].mxu0
        %v612 = vadd.f32 %v405, %v611
        %613 = vmatprep.mubr.f32.mxu0 %v427
        %614 = vmatmul.mubr.f32.gmra.mrb[0].mxu0 %v278
        %v615 = vpop.f32.mrb[0].mxu0
        %v616 = vadd.f32 %v410, %v615
        %v617 = vpop.f32.mrb[0].mxu0
        %v618 = vadd.f32 %v410, %v617
        %619 = vmatprep.mubr.f32.mxu0 %v430
        %620 = vmatmul.mubr.f32.gmra.mrb[0].mxu0 %v280
        %v621 = vpop.f32.mrb[0].mxu0
        %v622 = vadd.f32 %v415, %v621
        %v623 = vpop.f32.mrb[0].mxu0
        %v624 = vadd.f32 %v415, %v623
        %625 = vmatprep.mubr.f32.mxu0 %v433
        %626 = vmatmul.mubr.f32.gmra.mrb[0].mxu0 %v282
        %v627 = vpop.f32.mrb[0].mxu0
        %v628 = vadd.f32 %v420, %v627
        %v629 = vpop.f32.mrb[0].mxu0
        %v630 = vadd.f32 %v420, %v629
        %631 = vdwg.mxu0
        %632 = vmatprep.subr.mxu0 %v289
        %633 = vmatpush1.msra.mxu0 %v288
        %634 = vmatprep.subr.mxu0 %v295
        %635 = vmatpush1.msra.mxu0 %v294
        %636 = vmatprep.subr.mxu0 %v301
        %637 = vmatpush1.msra.mxu0 %v300
        %638 = vmatprep.subr.mxu0 %v307
        %639 = vmatpush1.msra.mxu0 %v306
        %640 = vmatprep.subr.mxu0 %v313
        %641 = vmatpush1.msra.mxu0 %v312
        %642 = vmatprep.subr.mxu0 %v319
        %643 = vmatpush1.msra.mxu0 %v318
        %644 = vmatprep.subr.mxu0 %v325
        %645 = vmatpush1.msra.mxu0 %v324
        %646 = vmatprep.subr.mxu0 %v331
        %647 = vmatpush1.msra.mxu0 %v330
        %648 = vmatprep.subr.mxu0 %v337
        %649 = vmatpush1.msra.mxu0 %v336
        %650 = vmatprep.subr.mxu0 %v343
        %651 = vmatpush1.msra.mxu0 %v342
        %652 = vmatprep.subr.mxu0 %v349
        %653 = vmatpush1.msra.mxu0 %v348
        %654 = vmatprep.subr.mxu0 %v355
        %655 = vmatpush1.msra.mxu0 %v354
        %656 = vmatprep.subr.mxu0 %v361
        %657 = vmatpush1.msra.mxu0 %v360
        %658 = vmatprep.subr.mxu0 %v367
        %659 = vmatpush1.msra.mxu0 %v366
        %660 = vmatprep.subr.mxu0 %v373
        %661 = vmatpush1.msra.mxu0 %v372
        %662 = vmatprep.subr.mxu0 %v379
        %663 = vmatpush1.msra.mxu0 %v378
        %664 = vmatprep.subr.mxu0 %v385
        %665 = vmatpush1.msra.mxu0 %v384
        %666 = vmatprep.subr.mxu0 %v391
        %667 = vmatpush1.msra.mxu0 %v390
        %668 = vmatprep.subr.mxu0 %v452
        %669 = vmatpush1.msra.mxu0 %v449
        %670 = vmatprep.subr.mxu0 0.0
        %671 = vmatpush1.msra.mxu0 0.0
        %672 = vmatprep.subr.mxu0 0.0
        %673 = vmatpush1.msra.mxu0 0.0
        %674 = vmatprep.subr.mxu0 0.0
        %675 = vmatpush1.msra.mxu0 0.0
        %676 = vmatprep.subr.mxu0 0.0
        %677 = vmatpush1.msra.mxu0 0.0
        %678 = vmatprep.subr.mxu0 0.0
        %679 = vmatpush1.msra.mxu0 0.0
        %680 = vmatprep.subr.mxu0 0.0
        %681 = vmatpush1.msra.mxu0 0.0
        %682 = vmatprep.subr.mxu0 0.0
        %683 = vmatpush1.msra.mxu0 0.0
        %684 = vmatprep.subr.mxu0 0.0
        %685 = vmatpush1.msra.mxu0 0.0
        %686 = vmatprep.subr.mxu0 0.0
        %687 = vmatpush1.msra.mxu0 0.0
        %688 = vmatprep.subr.mxu0 0.0
        %689 = vmatpush1.msra.mxu0 0.0
        %690 = vmatprep.subr.mxu0 0.0
        %691 = vmatpush1.msra.mxu0 0.0
        %692 = vmatprep.subr.mxu0 0.0
        %693 = vmatpush1.msra.mxu0 0.0
        %694 = vmatprep.subr.mxu0 0.0
        %695 = vmatpush1.msra.mxu0 0.0
        %696 = vmatprep.mubr.f32.mxu0 %v424
        %697 = vmatmul.mubr.f32.gmra.mrb[0].mxu0 %v276
        %v698 = vpop.f32.mrb[0].mxu0
        %v699 = vadd.f32 %v405, %v698
        %v700 = vpop.f32.mrb[0].mxu0
        %v701 = vadd.f32 %v405, %v700
        %702 = vmatprep.mubr.f32.mxu0 %v427
        %703 = vmatmul.mubr.f32.gmra.mrb[0].mxu0 %v278
        %v704 = vpop.f32.mrb[0].mxu0
        %v705 = vadd.f32 %v410, %v704
        %v706 = vpop.f32.mrb[0].mxu0
        %v707 = vadd.f32 %v410, %v706
        %708 = vmatprep.mubr.f32.mxu0 %v430
        %709 = vmatmul.mubr.f32.gmra.mrb[0].mxu0 %v280
        %v710 = vpop.f32.mrb[0].mxu0
        %v711 = vadd.f32 %v415, %v710
        %v712 = vpop.f32.mrb[0].mxu0
        %v713 = vadd.f32 %v415, %v712
        %714 = vmatprep.mubr.f32.mxu0 %v433
        %715 = vmatmul.mubr.f32.gmra.mrb[0].mxu0 %v282
        %v716 = vpop.f32.mrb[0].mxu0
        %v717 = vadd.f32 %v420, %v716
        %v718 = vpop.f32.mrb[0].mxu0
        %v719 = vadd.f32 %v420, %v718
        %720 = vdwg.mxu0
        %745 = vrot.lane.b32.xlu0 %v521, 127
        %v746 = vpop.permute.xlu0 %745
        %747 = vrot.lane.b32.xlu0 %v523, 127
        %v748 = vpop.permute.xlu0 %747
        %749 = vrot.lane.b32.xlu0 %v610, 127
        %v750 = vpop.permute.xlu0 %749
        %751 = vrot.lane.b32.xlu0 %v612, 127
        %v752 = vpop.permute.xlu0 %751
        %753 = vrot.lane.b32.xlu0 %v699, 127
        %v754 = vpop.permute.xlu0 %753
        %755 = vrot.lane.b32.xlu0 %v701, 127
        %v756 = vpop.permute.xlu0 %755
        %757 = vrot.lane.b32.xlu0 %v527, 127
        %v758 = vpop.permute.xlu0 %757
        %759 = vrot.lane.b32.xlu0 %v529, 127
        %v760 = vpop.permute.xlu0 %759
        %761 = vrot.lane.b32.xlu0 %v616, 127
        %v762 = vpop.permute.xlu0 %761
        %763 = vrot.lane.b32.xlu0 %v618, 127
        %v764 = vpop.permute.xlu0 %763
        %765 = vrot.lane.b32.xlu0 %v705, 127
        %v766 = vpop.permute.xlu0 %765
        %767 = vrot.lane.b32.xlu0 %v707, 127
        %v768 = vpop.permute.xlu0 %767
        %769 = vrot.lane.b32.xlu0 %v533, 127
        %v770 = vpop.permute.xlu0 %769
        %771 = vrot.lane.b32.xlu0 %v535, 127
        %v772 = vpop.permute.xlu0 %771
        %773 = vrot.lane.b32.xlu0 %v622, 127
        %v774 = vpop.permute.xlu0 %773
        %775 = vrot.lane.b32.xlu0 %v624, 127
        %v776 = vpop.permute.xlu0 %775
        %777 = vrot.lane.b32.xlu0 %v711, 127
        %v778 = vpop.permute.xlu0 %777
        %779 = vrot.lane.b32.xlu0 %v713, 127
        %v780 = vpop.permute.xlu0 %779
        %781 = vrot.lane.b32.xlu0 %v539, 127
        %v782 = vpop.permute.xlu0 %781
        %783 = vrot.lane.b32.xlu0 %v541, 127
        %v784 = vpop.permute.xlu0 %783
        %785 = vrot.lane.b32.xlu0 %v628, 127
        %v786 = vpop.permute.xlu0 %785
        %787 = vrot.lane.b32.xlu0 %v630, 127
        %v788 = vpop.permute.xlu0 %787
        %789 = vrot.lane.b32.xlu0 %v717, 127
        %v790 = vpop.permute.xlu0 %789
        %791 = vrot.lane.b32.xlu0 %v719, 127
        %v792 = vpop.permute.xlu0 %791
        %vm793 = vcmask 1039360
        %v794 = vsel %vm793, %v746, %v748
        %v795 = vsel %vm793, %v748, %v750
        %v796 = vsel %vm793, %v750, %v752
        %v797 = vsel %vm793, %v752, %v754
        %v798 = vsel %vm793, %v754, %v756
        %v799 = vsel %vm793, %v758, %v760
        %v800 = vsel %vm793, %v760, %v762
        %v801 = vsel %vm793, %v762, %v764
        %v802 = vsel %vm793, %v764, %v766
        %v803 = vsel %vm793, %v766, %v768
        %v804 = vsel %vm793, %v770, %v772
        %v805 = vsel %vm793, %v772, %v774
        %v806 = vsel %vm793, %v774, %v776
        %v807 = vsel %vm793, %v776, %v778
        %v808 = vsel %vm793, %v778, %v780
        %v809 = vsel %vm793, %v782, %v784
        %v810 = vsel %vm793, %v784, %v786
        %v811 = vsel %vm793, %v786, %v788
        %v812 = vsel %vm793, %v788, %v790
        %v813 = vsel %vm793, %v790, %v792
        %v838 = vmax.f32 %v521, %v794
        %v839 = vmax.f32 %v523, %v795
        %v840 = vmax.f32 %v610, %v796
        %v841 = vmax.f32 %v612, %v797
        %v842 = vmax.f32 %v699, %v798
        %v843 = vmax.f32 %v701, %v756
        %v844 = vmax.f32 %v527, %v799
        %v845 = vmax.f32 %v529, %v800
        %v846 = vmax.f32 %v616, %v801
        %v847 = vmax.f32 %v618, %v802
        %v848 = vmax.f32 %v705, %v803
        %v849 = vmax.f32 %v707, %v768
        %v850 = vmax.f32 %v533, %v804
        %v851 = vmax.f32 %v535, %v805
        %v852 = vmax.f32 %v622, %v806
        %v853 = vmax.f32 %v624, %v807
        %v854 = vmax.f32 %v711, %v808
        %v855 = vmax.f32 %v713, %v780
        %v856 = vmax.f32 %v539, %v809
        %v857 = vmax.f32 %v541, %v810
        %v858 = vmax.f32 %v628, %v811
        %v859 = vmax.f32 %v630, %v812
        %v860 = vmax.f32 %v717, %v813
        %v861 = vmax.f32 %v719, %v792
        %886 = vrot.lane.b32.xlu0 %v838, 102
        %v887 = vpop.permute.xlu0 %886
        %888 = vrot.lane.b32.xlu0 %v839, 102
        %v889 = vpop.permute.xlu0 %888
        %890 = vrot.lane.b32.xlu0 %v840, 102
        %v891 = vpop.permute.xlu0 %890
        %892 = vrot.lane.b32.xlu0 %v841, 102
        %v893 = vpop.permute.xlu0 %892
        %894 = vrot.lane.b32.xlu0 %v842, 102
        %v895 = vpop.permute.xlu0 %894
        %896 = vrot.lane.b32.xlu0 %v843, 102
        %v897 = vpop.permute.xlu0 %896
        %898 = vrot.lane.b32.xlu0 %v844, 102
        %v899 = vpop.permute.xlu0 %898
        %900 = vrot.lane.b32.xlu0 %v845, 102
        %v901 = vpop.permute.xlu0 %900
        %902 = vrot.lane.b32.xlu0 %v846, 102
        %v903 = vpop.permute.xlu0 %902
        %904 = vrot.lane.b32.xlu0 %v847, 102
        %v905 = vpop.permute.xlu0 %904
        %906 = vrot.lane.b32.xlu0 %v848, 102
        %v907 = vpop.permute.xlu0 %906
        %908 = vrot.lane.b32.xlu0 %v849, 102
        %v909 = vpop.permute.xlu0 %908
        %910 = vrot.lane.b32.xlu0 %v850, 102
        %v911 = vpop.permute.xlu0 %910
        %912 = vrot.lane.b32.xlu0 %v851, 102
        %v913 = vpop.permute.xlu0 %912
        %914 = vrot.lane.b32.xlu0 %v852, 102
        %v915 = vpop.permute.xlu0 %914
        %916 = vrot.lane.b32.xlu0 %v853, 102
        %v917 = vpop.permute.xlu0 %916
        %918 = vrot.lane.b32.xlu0 %v854, 102
        %v919 = vpop.permute.xlu0 %918
        %920 = vrot.lane.b32.xlu0 %v855, 102
        %v921 = vpop.permute.xlu0 %920
        %922 = vrot.lane.b32.xlu0 %v856, 102
        %v923 = vpop.permute.xlu0 %922
        %924 = vrot.lane.b32.xlu0 %v857, 102
        %v925 = vpop.permute.xlu0 %924
        %926 = vrot.lane.b32.xlu0 %v858, 102
        %v927 = vpop.permute.xlu0 %926
        %928 = vrot.lane.b32.xlu0 %v859, 102
        %v929 = vpop.permute.xlu0 %928
        %930 = vrot.lane.b32.xlu0 %v860, 102
        %v931 = vpop.permute.xlu0 %930
        %932 = vrot.lane.b32.xlu0 %v861, 102
        %v933 = vpop.permute.xlu0 %932
        %vm934 = vcmask 834560
        %v935 = vsel %vm934, %v887, %v889
        %v936 = vsel %vm934, %v889, %v891
        %v937 = vsel %vm934, %v891, %v893
        %v938 = vsel %vm934, %v893, %v895
        %v939 = vsel %vm934, %v895, %v897
        %v940 = vsel %vm934, %v899, %v901
        %v941 = vsel %vm934, %v901, %v903
        %v942 = vsel %vm934, %v903, %v905
        %v943 = vsel %vm934, %v905, %v907
        %v944 = vsel %vm934, %v907, %v909
        %v945 = vsel %vm934, %v911, %v913
        %v946 = vsel %vm934, %v913, %v915
        %v947 = vsel %vm934, %v915, %v917
        %v948 = vsel %vm934, %v917, %v919
        %v949 = vsel %vm934, %v919, %v921
        %v950 = vsel %vm934, %v923, %v925
        %v951 = vsel %vm934, %v925, %v927
        %v952 = vsel %vm934, %v927, %v929
        %v953 = vsel %vm934, %v929, %v931
        %v954 = vsel %vm934, %v931, %v933
        %v979 = vmax.f32 %v838, %v935
        %v980 = vmax.f32 %v839, %v936
        %v981 = vmax.f32 %v840, %v937
        %v982 = vmax.f32 %v841, %v938
        %v983 = vmax.f32 %v842, %v939
        %v984 = vmax.f32 %v843, %v897
        %v985 = vmax.f32 %v844, %v940
        %v986 = vmax.f32 %v845, %v941
        %v987 = vmax.f32 %v846, %v942
        %v988 = vmax.f32 %v847, %v943
        %v989 = vmax.f32 %v848, %v944
        %v990 = vmax.f32 %v849, %v909
        %v991 = vmax.f32 %v850, %v945
        %v992 = vmax.f32 %v851, %v946
        %v993 = vmax.f32 %v852, %v947
        %v994 = vmax.f32 %v853, %v948
        %v995 = vmax.f32 %v854, %v949
        %v996 = vmax.f32 %v855, %v921
        %v997 = vmax.f32 %v856, %v950
        %v998 = vmax.f32 %v857, %v951
        %v999 = vmax.f32 %v858, %v952
        %v1000 = vmax.f32 %v859, %v953
        %v1001 = vmax.f32 %v860, %v954
        %v1002 = vmax.f32 %v861, %v933
        %v1003 = vmax.f32 %v979, 0.0
        %v1004 = vmax.f32 %v980, 0.0
        %v1005 = vmax.f32 %v981, 0.0
        %v1006 = vmax.f32 %v982, 0.0
        %v1007 = vmax.f32 %v983, 0.0
        %v1008 = vmax.f32 %v984, 0.0
        %v1009 = vmax.f32 %v985, 0.0
        %v1010 = vmax.f32 %v986, 0.0
        %v1011 = vmax.f32 %v987, 0.0
        %v1012 = vmax.f32 %v988, 0.0
        %v1013 = vmax.f32 %v989, 0.0
        %v1014 = vmax.f32 %v990, 0.0
        %v1015 = vmax.f32 %v991, 0.0
        %v1016 = vmax.f32 %v992, 0.0
        %v1017 = vmax.f32 %v993, 0.0
        %v1018 = vmax.f32 %v994, 0.0
        %v1019 = vmax.f32 %v995, 0.0
        %v1020 = vmax.f32 %v996, 0.0
        %v1021 = vmax.f32 %v997, 0.0
        %v1022 = vmax.f32 %v998, 0.0
        %v1023 = vmax.f32 %v999, 0.0
        %v1024 = vmax.f32 %v1000, 0.0
        %v1025 = vmax.f32 %v1001, 0.0
        %v1026 = vmax.f32 %v1002, 0.0
        %v1027 = vld [vmem:[%s3] sm:$0xff]
        %v1028 = vld [vmem:[%s3 + $0x8] sm:$0xff]
        %v1029 = vld [vmem:[%s3 + $0x10] sm:$0xff]
        %v1030 = vld [vmem:[%s3 + $0x18] sm:$0xff]
        %v1031 = vld [vmem:[%s3 + $0x20] sm:$0xff]
        %v1032 = vld [vmem:[%s3 + $0x28] sm:$0xff]
        %v1033 = vld [vmem:[%s3 + $0x30] sm:$0xff]
        %v1034 = vld [vmem:[%s3 + $0x38] sm:$0xff]
        %v1035 = vld [vmem:[%s3 + $0x40] sm:$0xff]
        %v1036 = vld [vmem:[%s3 + $0x48] sm:$0xff]
        %v1037 = vld [vmem:[%s3 + $0x50] sm:$0xff]
        %v1038 = vld [vmem:[%s3 + $0x58] sm:$0xff]
        %v1039 = vld [vmem:[%s3 + $0x60] sm:$0xff]
        %v1040 = vld [vmem:[%s3 + $0x68] sm:$0xff]
        %v1041 = vld [vmem:[%s3 + $0x70] sm:$0xff]
        %v1042 = vld [vmem:[%s3 + $0x78] sm:$0xff]
        %v1043 = vld [vmem:[%s3 + $0x80] sm:$0xff]
        %v1044 = vld [vmem:[%s3 + $0x88] sm:$0xff]
        %v1045 = vld [vmem:[%s3 + $0x90] sm:$0xff]
        %v1046 = vld [vmem:[%s3 + $0x98] sm:$0xff]
        %v1047 = vld [vmem:[%s3 + $0xa0] sm:$0xff]
        %v1048 = vld [vmem:[%s3 + $0xa8] sm:$0xff]
        %v1049 = vld [vmem:[%s3 + $0xb0] sm:$0xff]
        %v1050 = vld [vmem:[%s3 + $0xb8] sm:$0xff]
        %v1051 = vld [vmem:[%s3 + $0xc0] sm:$0xff]
        %v1052 = vld [vmem:[%s3 + $0xc8] sm:$0xff]
        %v1053 = vld [vmem:[%s3 + $0xd0] sm:$0xff]
        %v1054 = vld [vmem:[%s3 + $0xd8] sm:$0xff]
        %v1055 = vld [vmem:[%s3 + $0xe0] sm:$0xff]
        %v1056 = vld [vmem:[%s3 + $0xe8] sm:$0xff]
        %v1057 = vld [vmem:[%s3 + $0xf0] sm:$0xff]
        %v1058 = vld [vmem:[%s3 + $0xf8] sm:$0xff]
        %v1059 = vld [vmem:[%s3 + $0x100] sm:$0xff]
        %v1060 = vld [vmem:[%s3 + $0x108] sm:$0xff]
        %v1061 = vld [vmem:[%s3 + $0x110] sm:$0xff]
        %v1062 = vld [vmem:[%s3 + $0x118] sm:$0xff]
        %v1063 = vld [vmem:[%s3 + $0x120] sm:$0xff]
        %v1064 = vld [vmem:[%s3 + $0x128] sm:$0xff]
        %v1065 = vld [vmem:[%s3 + $0x130] sm:$0xff]
        %v1066 = vld [vmem:[%s3 + $0x138] sm:$0xff]
        %v1067 = vld [vmem:[%s3 + $0x140] sm:$0xff]
        %v1068 = vld [vmem:[%s3 + $0x148] sm:$0xff]
        %v1069 = vld [vmem:[%s3 + $0x150] sm:$0xff]
        %v1070 = vld [vmem:[%s3 + $0x158] sm:$0xff]
        %v1071 = vld [vmem:[%s3 + $0x160] sm:$0xff]
        %v1072 = vld [vmem:[%s3 + $0x168] sm:$0xff]
        %v1073 = vld [vmem:[%s3 + $0x170] sm:$0xff]
        %v1074 = vld [vmem:[%s3 + $0x178] sm:$0xff]
        %v1075 = vld [vmem:[%s3 + $0x180] sm:$0xff]
        %v1076 = vld [vmem:[%s3 + $0x188] sm:$0xff]
        %v1077 = vld [vmem:[%s3 + $0x190] sm:$0xff]
        %v1078 = vld [vmem:[%s3 + $0x198] sm:$0xff]
        %v1079 = vld [vmem:[%s3 + $0x1a0] sm:$0xff]
        %v1080 = vld [vmem:[%s3 + $0x1a8] sm:$0xff]
        %v1081 = vld [vmem:[%s3 + $0x1b0] sm:$0xff]
        %v1082 = vld [vmem:[%s3 + $0x1b8] sm:$0xff]
        %v1083 = vld [vmem:[%s3 + $0x1c0] sm:$0xff]
        %v1084 = vld [vmem:[%s3 + $0x1c8] sm:$0xff]
        %v1085 = vld [vmem:[%s3 + $0x1d0] sm:$0xff]
        %v1086 = vld [vmem:[%s3 + $0x1d8] sm:$0xff]
        %v1087 = vld [vmem:[%s3 + $0x1e0] sm:$0xff]
        %v1088 = vld [vmem:[%s3 + $0x1e8] sm:$0xff]
        %v1089 = vld [vmem:[%s3 + $0x1f0] sm:$0xff]
        %v1090 = vld [vmem:[%s3 + $0x1f8] sm:$0xff]
        %v1091 = vld [vmem:[%s3 + $0x200] sm:$0xff]
        %v1092 = vld [vmem:[%s3 + $0x208] sm:$0xff]
        %v1093 = vld [vmem:[%s3 + $0x210] sm:$0xff]
        %v1094 = vld [vmem:[%s3 + $0x218] sm:$0xff]
        %v1095 = vld [vmem:[%s3 + $0x220] sm:$0xff]
        %v1096 = vld [vmem:[%s3 + $0x228] sm:$0xff]
        %v1097 = vld [vmem:[%s3 + $0x230] sm:$0xff]
        %v1098 = vld [vmem:[%s3 + $0x238] sm:$0xff]
        %v1099 = vld [vmem:[%s3 + $0x240] sm:$0xff]
        %v1100 = vld [vmem:[%s3 + $0x248] sm:$0xff]
        %v1101 = vld [vmem:[%s3 + $0x250] sm:$0xff]
        %v1102 = vld [vmem:[%s3 + $0x258] sm:$0xff]
        %v1103 = vld [vmem:[%s3 + $0x260] sm:$0xff]
        %v1104 = vld [vmem:[%s3 + $0x268] sm:$0xff]
        %v1105 = vld [vmem:[%s3 + $0x270] sm:$0xff]
        %v1106 = vld [vmem:[%s3 + $0x278] sm:$0xff]
        %v1107 = vld [vmem:[%s3 + $0x280] sm:$0xff]
        %v1108 = vld [vmem:[%s3 + $0x288] sm:$0xff]
        %v1109 = vld [vmem:[%s3 + $0x290] sm:$0xff]
        %v1110 = vld [vmem:[%s3 + $0x298] sm:$0xff]
        %v1111 = vld [vmem:[%s3 + $0x2a0] sm:$0xff]
        %v1112 = vld [vmem:[%s3 + $0x2a8] sm:$0xff]
        %v1113 = vld [vmem:[%s3 + $0x2b0] sm:$0xff]
        %v1114 = vld [vmem:[%s3 + $0x2b8] sm:$0xff]
        %v1115 = vld [vmem:[%s3 + $0x2c0] sm:$0xff]
        %v1116 = vld [vmem:[%s3 + $0x2c8] sm:$0xff]
        %v1117 = vld [vmem:[%s3 + $0x2d0] sm:$0xff]
        %v1118 = vld [vmem:[%s3 + $0x2d8] sm:$0xff]
        %v1119 = vld [vmem:[%s3 + $0x2e0] sm:$0xff]
        %v1120 = vld [vmem:[%s3 + $0x2e8] sm:$0xff]
        %v1121 = vld [vmem:[%s3 + $0x2f0] sm:$0xff]
        %v1122 = vld [vmem:[%s3 + $0x2f8] sm:$0xff]
        %v1123 = vld [vmem:[%s3 + $0x300] sm:$0xff]
        %v1124 = vld [vmem:[%s3 + $0x308] sm:$0xff]
        %v1125 = vld [vmem:[%s3 + $0x310] sm:$0xff]
        %v1126 = vld [vmem:[%s3 + $0x318] sm:$0xff]
        %v1127 = vld [vmem:[%s3 + $0x320] sm:$0xff]
        %v1128 = vld [vmem:[%s3 + $0x328] sm:$0xff]
        %v1129 = vld [vmem:[%s3 + $0x330] sm:$0xff]
        %v1130 = vld [vmem:[%s3 + $0x338] sm:$0xff]
        %v1131 = vld [vmem:[%s3 + $0x340] sm:$0xff]
        %v1132 = vld [vmem:[%s3 + $0x348] sm:$0xff]
        %v1133 = vld [vmem:[%s3 + $0x350] sm:$0xff]
        %v1134 = vld [vmem:[%s3 + $0x358] sm:$0xff]
        %v1135 = vld [vmem:[%s3 + $0x360] sm:$0xff]
        %v1136 = vld [vmem:[%s3 + $0x368] sm:$0xff]
        %v1137 = vld [vmem:[%s3 + $0x370] sm:$0xff]
        %v1138 = vld [vmem:[%s3 + $0x378] sm:$0xff]
        %v1139 = vld [vmem:[%s3 + $0x380] sm:$0xff]
        %v1140 = vld [vmem:[%s3 + $0x388] sm:$0xff]
        %v1141 = vld [vmem:[%s3 + $0x390] sm:$0xff]
        %v1142 = vld [vmem:[%s3 + $0x398] sm:$0xff]
        %v1143 = vld [vmem:[%s3 + $0x3a0] sm:$0xff]
        %v1144 = vld [vmem:[%s3 + $0x3a8] sm:$0xff]
        %v1145 = vld [vmem:[%s3 + $0x3b0] sm:$0xff]
        %v1146 = vld [vmem:[%s3 + $0x3b8] sm:$0xff]
        %v1147 = vld [vmem:[%s3 + $0x3c0] sm:$0xff]
        %v1148 = vld [vmem:[%s3 + $0x3c8] sm:$0xff]
        %v1149 = vld [vmem:[%s3 + $0x3d0] sm:$0xff]
        %v1150 = vld [vmem:[%s3 + $0x3d8] sm:$0xff]
        %v1151 = vld [vmem:[%s3 + $0x3e0] sm:$0xff]
        %v1152 = vld [vmem:[%s3 + $0x3e8] sm:$0xff]
        %v1153 = vld [vmem:[%s3 + $0x3f0] sm:$0xff]
        %v1154 = vld [vmem:[%s3 + $0x3f8] sm:$0xff]
        %v1155 = vld [vmem:[%s3 + $0x400] sm:$0xff]
        %v1156 = vld [vmem:[%s3 + $0x408] sm:$0xff]
        %v1157 = vld [vmem:[%s3 + $0x410] sm:$0xff]
        %v1158 = vld [vmem:[%s3 + $0x418] sm:$0xff]
        %v1159 = vld [vmem:[%s3 + $0x420] sm:$0xff]
        %v1160 = vld [vmem:[%s3 + $0x428] sm:$0xff]
        %v1161 = vld [vmem:[%s3 + $0x430] sm:$0xff]
        %v1162 = vld [vmem:[%s3 + $0x438] sm:$0xff]
        %v1163 = vld [vmem:[%s3 + $0x440] sm:$0xff]
        %v1164 = vld [vmem:[%s3 + $0x448] sm:$0xff]
        %v1165 = vld [vmem:[%s3 + $0x450] sm:$0xff]
        %v1166 = vld [vmem:[%s3 + $0x458] sm:$0xff]
        %v1167 = vld [vmem:[%s3 + $0x460] sm:$0xff]
        %v1168 = vld [vmem:[%s3 + $0x468] sm:$0xff]
        %v1169 = vld [vmem:[%s3 + $0x470] sm:$0xff]
        %v1170 = vld [vmem:[%s3 + $0x478] sm:$0xff]
        %v1171 = vld [vmem:[%s3 + $0x480] sm:$0xff]
        %v1172 = vld [vmem:[%s3 + $0x488] sm:$0xff]
        %v1173 = vld [vmem:[%s3 + $0x490] sm:$0xff]
        %v1174 = vld [vmem:[%s3 + $0x498] sm:$0xff]
        %v1175 = vld [vmem:[%s3 + $0x4a0] sm:$0xff]
        %v1176 = vld [vmem:[%s3 + $0x4a8] sm:$0xff]
        %v1177 = vld [vmem:[%s3 + $0x4b0] sm:$0xff]
        %v1178 = vld [vmem:[%s3 + $0x4b8] sm:$0xff]
        %v1179 = vld [vmem:[%s3 + $0x4c0] sm:$0xff]
        %v1180 = vld [vmem:[%s3 + $0x4c8] sm:$0xff]
        %v1181 = vld [vmem:[%s3 + $0x4d0] sm:$0xff]
        %v1182 = vld [vmem:[%s3 + $0x4d8] sm:$0xff]
        %v1183 = vld [vmem:[%s3 + $0x4e0] sm:$0xff]
        %v1184 = vld [vmem:[%s3 + $0x4e8] sm:$0xff]
        %v1185 = vld [vmem:[%s3 + $0x4f0] sm:$0xff]
        %v1186 = vld [vmem:[%s3 + $0x4f8] sm:$0xff]
        %v1187 = vld [vmem:[%s3 + $0x500] sm:$0xff]
        %v1188 = vld [vmem:[%s3 + $0x508] sm:$0xff]
        %v1189 = vld [vmem:[%s3 + $0x510] sm:$0xff]
        %v1190 = vld [vmem:[%s3 + $0x518] sm:$0xff]
        %v1191 = vld [vmem:[%s3 + $0x520] sm:$0xff]
        %v1192 = vld [vmem:[%s3 + $0x528] sm:$0xff]
        %v1193 = vld [vmem:[%s3 + $0x530] sm:$0xff]
        %v1194 = vld [vmem:[%s3 + $0x538] sm:$0xff]
        %v1195 = vld [vmem:[%s3 + $0x540] sm:$0xff]
        %v1196 = vld [vmem:[%s3 + $0x548] sm:$0xff]
        %v1197 = vld [vmem:[%s3 + $0x550] sm:$0xff]
        %v1198 = vld [vmem:[%s3 + $0x558] sm:$0xff]
        %v1199 = vld [vmem:[%s3 + $0x560] sm:$0xff]
        %v1200 = vld [vmem:[%s3 + $0x568] sm:$0xff]
        %v1201 = vld [vmem:[%s3 + $0x570] sm:$0xff]
        %v1202 = vld [vmem:[%s3 + $0x578] sm:$0xff]
        %v1203 = vld [vmem:[%s3 + $0x580] sm:$0xff]
        %v1204 = vld [vmem:[%s3 + $0x588] sm:$0xff]
        %v1205 = vld [vmem:[%s3 + $0x590] sm:$0xff]
        %v1206 = vld [vmem:[%s3 + $0x598] sm:$0xff]
        %v1207 = vld [vmem:[%s3 + $0x5a0] sm:$0xff]
        %v1208 = vld [vmem:[%s3 + $0x5a8] sm:$0xff]
        %v1209 = vld [vmem:[%s3 + $0x5b0] sm:$0xff]
        %v1210 = vld [vmem:[%s3 + $0x5b8] sm:$0xff]
        %v1211 = vld [vmem:[%s3 + $0x5c0] sm:$0xff]
        %v1212 = vld [vmem:[%s3 + $0x5c8] sm:$0xff]
        %v1213 = vld [vmem:[%s3 + $0x5d0] sm:$0xff]
        %v1214 = vld [vmem:[%s3 + $0x5d8] sm:$0xff]
        %v1215 = vld [vmem:[%s3 + $0x5e0] sm:$0xff]
        %v1216 = vld [vmem:[%s3 + $0x5e8] sm:$0xff]
        %v1217 = vld [vmem:[%s3 + $0x5f0] sm:$0xff]
        %v1218 = vld [vmem:[%s3 + $0x5f8] sm:$0xff]
        %v1219 = vld [vmem:[%s3 + $0x600] sm:$0xff]
        %v1220 = vld [vmem:[%s3 + $0x608] sm:$0xff]
        %v1221 = vld [vmem:[%s3 + $0x610] sm:$0xff]
        %v1222 = vld [vmem:[%s3 + $0x618] sm:$0xff]
        %v1223 = vld [vmem:[%s3 + $0x620] sm:$0xff]
        %v1224 = vld [vmem:[%s3 + $0x628] sm:$0xff]
        %v1225 = vld [vmem:[%s3 + $0x630] sm:$0xff]
        %v1226 = vld [vmem:[%s3 + $0x638] sm:$0xff]
        %v1227 = vld [vmem:[%s3 + $0x640] sm:$0xff]
        %v1228 = vld [vmem:[%s3 + $0x648] sm:$0xff]
        %v1229 = vld [vmem:[%s3 + $0x650] sm:$0xff]
        %v1230 = vld [vmem:[%s3 + $0x658] sm:$0xff]
        %v1231 = vld [vmem:[%s3 + $0x660] sm:$0xff]
        %v1232 = vld [vmem:[%s3 + $0x668] sm:$0xff]
        %v1233 = vld [vmem:[%s3 + $0x670] sm:$0xff]
        %v1234 = vld [vmem:[%s3 + $0x678] sm:$0xff]
        %v1235 = vld [vmem:[%s3 + $0x680] sm:$0xff]
        %v1236 = vld [vmem:[%s3 + $0x688] sm:$0xff]
        %v1237 = vld [vmem:[%s3 + $0x690] sm:$0xff]
        %v1238 = vld [vmem:[%s3 + $0x698] sm:$0xff]
        %v1239 = vld [vmem:[%s3 + $0x6a0] sm:$0xff]
        %v1240 = vld [vmem:[%s3 + $0x6a8] sm:$0xff]
        %v1241 = vld [vmem:[%s3 + $0x6b0] sm:$0xff]
        %v1242 = vld [vmem:[%s3 + $0x6b8] sm:$0xff]
        %v1243 = vld [vmem:[%s3 + $0x6c0] sm:$0xff]
        %v1244 = vld [vmem:[%s3 + $0x6c8] sm:$0xff]
        %v1245 = vld [vmem:[%s3 + $0x6d0] sm:$0xff]
        %v1246 = vld [vmem:[%s3 + $0x6d8] sm:$0xff]
        %v1247 = vld [vmem:[%s3 + $0x6e0] sm:$0xff]
        %v1248 = vld [vmem:[%s3 + $0x6e8] sm:$0xff]
        %v1249 = vld [vmem:[%s3 + $0x6f0] sm:$0xff]
        %v1250 = vld [vmem:[%s3 + $0x6f8] sm:$0xff]
        %v1251 = vld [vmem:[%s3 + $0x700] sm:$0xff]
        %v1252 = vld [vmem:[%s3 + $0x708] sm:$0xff]
        %v1253 = vld [vmem:[%s3 + $0x710] sm:$0xff]
        %v1254 = vld [vmem:[%s3 + $0x718] sm:$0xff]
        %v1255 = vld [vmem:[%s3 + $0x720] sm:$0xff]
        %v1256 = vld [vmem:[%s3 + $0x728] sm:$0xff]
        %v1257 = vld [vmem:[%s3 + $0x730] sm:$0xff]
        %v1258 = vld [vmem:[%s3 + $0x738] sm:$0xff]
        %v1259 = vld [vmem:[%s3 + $0x740] sm:$0xff]
        %v1260 = vld [vmem:[%s3 + $0x748] sm:$0xff]
        %v1261 = vld [vmem:[%s3 + $0x750] sm:$0xff]
        %v1262 = vld [vmem:[%s3 + $0x758] sm:$0xff]
        %v1263 = vld [vmem:[%s3 + $0x760] sm:$0xff]
        %v1264 = vld [vmem:[%s3 + $0x768] sm:$0xff]
        %v1265 = vld [vmem:[%s3 + $0x770] sm:$0xff]
        %v1266 = vld [vmem:[%s3 + $0x778] sm:$0xff]
        %v1267 = vld [vmem:[%s3 + $0x780] sm:$0xff]
        %v1268 = vld [vmem:[%s3 + $0x788] sm:$0xff]
        %v1269 = vld [vmem:[%s3 + $0x790] sm:$0xff]
        %v1270 = vld [vmem:[%s3 + $0x798] sm:$0x1]
        %v1271 = vld [vmem:[%s3 + $0x7a0] sm:$0x1]
        %v1272 = vld [vmem:[%s3 + $0x7a8] sm:$0x1]
        %vm1273 = vcmask 72704
        %v1275 = vsel %vm1273, %v1008, 0
        %v1278 = vsel %vm1273, %v1014, 0
        %v1281 = vsel %vm1273, %v1020, 0
        %v1284 = vsel %vm1273, %v1026, 0
        %vm1286 = vcmask 1040384
        %v1288 = vsel %vm1286, %v1270, 0
        %v1291 = vsel %vm1286, %v1271, 0
        %v1294 = vsel %vm1286, %v1272, 0
        %1296 = vmatprep.subr.mxu0 %v1028
        %1297 = vmatpush1.msra.mxu0 %v1027
        %1298 = vmatprep.subr.mxu0 %v1031
        %1299 = vmatpush1.msra.mxu0 %v1030
        %1300 = vmatprep.subr.mxu0 %v1034
        %1301 = vmatpush1.msra.mxu0 %v1033
        %1302 = vmatprep.subr.mxu0 %v1037
        %1303 = vmatpush1.msra.mxu0 %v1036
        %1304 = vmatprep.subr.mxu0 %v1040
        %1305 = vmatpush1.msra.mxu0 %v1039
        %1306 = vmatprep.subr.mxu0 %v1043
        %1307 = vmatpush1.msra.mxu0 %v1042
        %1308 = vmatprep.subr.mxu0 %v1046
        %1309 = vmatpush1.msra.mxu0 %v1045
        %1310 = vmatprep.subr.mxu0 %v1049
        %1311 = vmatpush1.msra.mxu0 %v1048
        %1312 = vmatprep.subr.mxu0 %v1052
        %1313 = vmatpush1.msra.mxu0 %v1051
        %1314 = vmatprep.subr.mxu0 %v1055
        %1315 = vmatpush1.msra.mxu0 %v1054
        %1316 = vmatprep.subr.mxu0 %v1058
        %1317 = vmatpush1.msra.mxu0 %v1057
        %1318 = vmatprep.subr.mxu0 %v1061
        %1319 = vmatpush1.msra.mxu0 %v1060
        %1320 = vmatprep.subr.mxu0 %v1064
        %1321 = vmatpush1.msra.mxu0 %v1063
        %1322 = vmatprep.subr.mxu0 %v1067
        %1323 = vmatpush1.msra.mxu0 %v1066
        %1324 = vmatprep.subr.mxu0 %v1070
        %1325 = vmatpush1.msra.mxu0 %v1069
        %1326 = vmatprep.subr.mxu0 %v1073
        %1327 = vmatpush1.msra.mxu0 %v1072
        %1328 = vmatprep.subr.mxu0 %v1076
        %1329 = vmatpush1.msra.mxu0 %v1075
        %1330 = vmatprep.subr.mxu0 %v1079
        %1331 = vmatpush1.msra.mxu0 %v1078
        %1332 = vmatprep.subr.mxu0 %v1082
        %1333 = vmatpush1.msra.mxu0 %v1081
        %1334 = vmatprep.subr.mxu0 %v1085
        %1335 = vmatpush1.msra.mxu0 %v1084
        %1336 = vmatprep.subr.mxu0 %v1088
        %1337 = vmatpush1.msra.mxu0 %v1087
        %1338 = vmatprep.subr.mxu0 %v1091
        %1339 = vmatpush1.msra.mxu0 %v1090
        %1340 = vmatprep.subr.mxu0 %v1094
        %1341 = vmatpush1.msra.mxu0 %v1093
        %1342 = vmatprep.subr.mxu0 %v1097
        %1343 = vmatpush1.msra.mxu0 %v1096
        %1344 = vmatprep.subr.mxu0 %v1100
        %1345 = vmatpush1.msra.mxu0 %v1099
        %1346 = vmatprep.subr.mxu0 %v1103
        %1347 = vmatpush1.msra.mxu0 %v1102
        %1348 = vmatprep.subr.mxu0 %v1106
        %1349 = vmatpush1.msra.mxu0 %v1105
        %1350 = vmatprep.subr.mxu0 %v1109
        %1351 = vmatpush1.msra.mxu0 %v1108
        %1352 = vmatprep.subr.mxu0 %v1112
        %1353 = vmatpush1.msra.mxu0 %v1111
        %1354 = vmatprep.subr.mxu0 %v1115
        %1355 = vmatpush1.msra.mxu0 %v1114
        %1356 = vmatprep.subr.mxu0 %v1118
        %1357 = vmatpush1.msra.mxu0 %v1117
        %1358 = vmatprep.subr.mxu0 %v1121
        %1359 = vmatpush1.msra.mxu0 %v1120
        %1360 = vmatprep.mubr.f32.mxu0 %v1004
        %1361 = vmatmul.mubr.f32.gmra.mrb[0].mxu0 %v1003
        %v1362 = vpop.f32.mrb[0].mxu0
        %v1363 = vadd.f32 0.0, %v1362
        %v1364 = vpop.f32.mrb[0].mxu0
        %v1365 = vadd.f32 0.0, %v1364
        %1366 = vmatprep.mubr.f32.mxu0 %v1010
        %1367 = vmatmul.mubr.f32.gmra.mrb[0].mxu0 %v1009
        %v1368 = vpop.f32.mrb[0].mxu0
        %v1369 = vadd.f32 0.0, %v1368
        %v1370 = vpop.f32.mrb[0].mxu0
        %v1371 = vadd.f32 0.0, %v1370
        %1372 = vmatprep.mubr.f32.mxu0 %v1016
        %1373 = vmatmul.mubr.f32.gmra.mrb[0].mxu0 %v1015
        %v1374 = vpop.f32.mrb[0].mxu0
        %v1375 = vadd.f32 0.0, %v1374
        %v1376 = vpop.f32.mrb[0].mxu0
        %v1377 = vadd.f32 0.0, %v1376
        %1378 = vmatprep.mubr.f32.mxu0 %v1022
        %1379 = vmatmul.mubr.f32.gmra.mrb[0].mxu0 %v1021
        %v1380 = vpop.f32.mrb[0].mxu0
        %v1381 = vadd.f32 0.0, %v1380
        %v1382 = vpop.f32.mrb[0].mxu0
        %v1383 = vadd.f32 0.0, %v1382
        %1384 = vdwg.mxu0
        %1385 = vmatprep.subr.mxu0 %v1124
        %1386 = vmatpush1.msra.mxu0 %v1123
        %1387 = vmatprep.subr.mxu0 %v1127
        %1388 = vmatpush1.msra.mxu0 %v1126
        %1389 = vmatprep.subr.mxu0 %v1130
        %1390 = vmatpush1.msra.mxu0 %v1129
        %1391 = vmatprep.subr.mxu0 %v1133
        %1392 = vmatpush1.msra.mxu0 %v1132
        %1393 = vmatprep.subr.mxu0 %v1136
        %1394 = vmatpush1.msra.mxu0 %v1135
        %1395 = vmatprep.subr.mxu0 %v1139
        %1396 = vmatpush1.msra.mxu0 %v1138
        %1397 = vmatprep.subr.mxu0 %v1142
        %1398 = vmatpush1.msra.mxu0 %v1141
        %1399 = vmatprep.subr.mxu0 %v1145
        %1400 = vmatpush1.msra.mxu0 %v1144
        %1401 = vmatprep.subr.mxu0 %v1148
        %1402 = vmatpush1.msra.mxu0 %v1147
        %1403 = vmatprep.subr.mxu0 %v1151
        %1404 = vmatpush1.msra.mxu0 %v1150
        %1405 = vmatprep.subr.mxu0 %v1154
        %1406 = vmatpush1.msra.mxu0 %v1153
        %1407 = vmatprep.subr.mxu0 %v1157
        %1408 = vmatpush1.msra.mxu0 %v1156
        %1409 = vmatprep.subr.mxu0 %v1160
        %1410 = vmatpush1.msra.mxu0 %v1159
        %1411 = vmatprep.subr.mxu0 %v1163
        %1412 = vmatpush1.msra.mxu0 %v1162
        %1413 = vmatprep.subr.mxu0 %v1166
        %1414 = vmatpush1.msra.mxu0 %v1165
        %1415 = vmatprep.subr.mxu0 %v1169
        %1416 = vmatpush1.msra.mxu0 %v1168
        %1417 = vmatprep.subr.mxu0 %v1172
        %1418 = vmatpush1.msra.mxu0 %v1171
        %1419 = vmatprep.subr.mxu0 %v1175
        %1420 = vmatpush1.msra.mxu0 %v1174
        %1421 = vmatprep.subr.mxu0 %v1178
        %1422 = vmatpush1.msra.mxu0 %v1177
        %1423 = vmatprep.subr.mxu0 %v1181
        %1424 = vmatpush1.msra.mxu0 %v1180
        %1425 = vmatprep.subr.mxu0 %v1184
        %1426 = vmatpush1.msra.mxu0 %v1183
        %1427 = vmatprep.subr.mxu0 %v1187
        %1428 = vmatpush1.msra.mxu0 %v1186
        %1429 = vmatprep.subr.mxu0 %v1190
        %1430 = vmatpush1.msra.mxu0 %v1189
        %1431 = vmatprep.subr.mxu0 %v1193
        %1432 = vmatpush1.msra.mxu0 %v1192
        %1433 = vmatprep.subr.mxu0 %v1196
        %1434 = vmatpush1.msra.mxu0 %v1195
        %1435 = vmatprep.subr.mxu0 %v1199
        %1436 = vmatpush1.msra.mxu0 %v1198
        %1437 = vmatprep.subr.mxu0 %v1202
        %1438 = vmatpush1.msra.mxu0 %v1201
        %1439 = vmatprep.subr.mxu0 %v1205
        %1440 = vmatpush1.msra.mxu0 %v1204
        %1441 = vmatprep.subr.mxu0 %v1208
        %1442 = vmatpush1.msra.mxu0 %v1207
        %1443 = vmatprep.subr.mxu0 %v1211
        %1444 = vmatpush1.msra.mxu0 %v1210
        %1445 = vmatprep.subr.mxu0 %v1214
        %1446 = vmatpush1.msra.mxu0 %v1213
        %1447 = vmatprep.subr.mxu0 %v1217
        %1448 = vmatpush1.msra.mxu0 %v1216
        %1449 = vmatprep.mubr.f32.mxu0 %v1006
        %1450 = vmatmul.mubr.f32.gmra.mrb[0].mxu0 %v1005
        %v1451 = vpop.f32.mrb[0].mxu0
        %v1452 = vadd.f32 %v1363, %v1451
        %v1453 = vpop.f32.mrb[0].mxu0
        %v1454 = vadd.f32 %v1365, %v1453
        %1455 = vmatprep.mubr.f32.mxu0 %v1012
        %1456 = vmatmul.mubr.f32.gmra.mrb[0].mxu0 %v1011
        %v1457 = vpop.f32.mrb[0].mxu0
        %v1458 = vadd.f32 %v1369, %v1457
        %v1459 = vpop.f32.mrb[0].mxu0
        %v1460 = vadd.f32 %v1371, %v1459
        %1461 = vmatprep.mubr.f32.mxu0 %v1018
        %1462 = vmatmul.mubr.f32.gmra.mrb[0].mxu0 %v1017
        %v1463 = vpop.f32.mrb[0].mxu0
        %v1464 = vadd.f32 %v1375, %v1463
        %v1465 = vpop.f32.mrb[0].mxu0
        %v1466 = vadd.f32 %v1377, %v1465
        %1467 = vmatprep.mubr.f32.mxu0 %v1024
        %1468 = vmatmul.mubr.f32.gmra.mrb[0].mxu0 %v1023
        %v1469 = vpop.f32.mrb[0].mxu0
        %v1470 = vadd.f32 %v1381, %v1469
        %v1471 = vpop.f32.mrb[0].mxu0
        %v1472 = vadd.f32 %v1383, %v1471
        %1473 = vdwg.mxu0
        %1474 = vmatprep.subr.mxu0 %v1220
        %1475 = vmatpush1.msra.mxu0 %v1219
        %1476 = vmatprep.subr.mxu0 %v1223
        %1477 = vmatpush1.msra.mxu0 %v1222
        %1478 = vmatprep.subr.mxu0 %v1226
        %1479 = vmatpush1.msra.mxu0 %v1225
        %1480 = vmatprep.subr.mxu0 %v1229
        %1481 = vmatpush1.msra.mxu0 %v1228
        %1482 = vmatprep.subr.mxu0 %v1232
        %1483 = vmatpush1.msra.mxu0 %v1231
        %1484 = vmatprep.subr.mxu0 %v1235
        %1485 = vmatpush1.msra.mxu0 %v1234
        %1486 = vmatprep.subr.mxu0 %v1238
        %1487 = vmatpush1.msra.mxu0 %v1237
        %1488 = vmatprep.subr.mxu0 %v1241
        %1489 = vmatpush1.msra.mxu0 %v1240
        %1490 = vmatprep.subr.mxu0 %v1244
        %1491 = vmatpush1.msra.mxu0 %v1243
        %1492 = vmatprep.subr.mxu0 %v1247
        %1493 = vmatpush1.msra.mxu0 %v1246
        %1494 = vmatprep.subr.mxu0 %v1250
        %1495 = vmatpush1.msra.mxu0 %v1249
        %1496 = vmatprep.subr.mxu0 %v1253
        %1497 = vmatpush1.msra.mxu0 %v1252
        %1498 = vmatprep.subr.mxu0 %v1256
        %1499 = vmatpush1.msra.mxu0 %v1255
        %1500 = vmatprep.subr.mxu0 %v1259
        %1501 = vmatpush1.msra.mxu0 %v1258
        %1502 = vmatprep.subr.mxu0 %v1262
        %1503 = vmatpush1.msra.mxu0 %v1261
        %1504 = vmatprep.subr.mxu0 %v1265
        %1505 = vmatpush1.msra.mxu0 %v1264
        %1506 = vmatprep.subr.mxu0 %v1268
        %1507 = vmatpush1.msra.mxu0 %v1267
        %1508 = vmatprep.subr.mxu0 %v1291
        %1509 = vmatpush1.msra.mxu0 %v1288
        %1510 = vmatprep.subr.mxu0 0.0
        %1511 = vmatpush1.msra.mxu0 0.0
        %1512 = vmatprep.subr.mxu0 0.0
        %1513 = vmatpush1.msra.mxu0 0.0
        %1514 = vmatprep.subr.mxu0 0.0
        %1515 = vmatpush1.msra.mxu0 0.0
        %1516 = vmatprep.subr.mxu0 0.0
        %1517 = vmatpush1.msra.mxu0 0.0
        %1518 = vmatprep.subr.mxu0 0.0
        %1519 = vmatpush1.msra.mxu0 0.0
        %1520 = vmatprep.subr.mxu0 0.0
        %1521 = vmatpush1.msra.mxu0 0.0
        %1522 = vmatprep.subr.mxu0 0.0
        %1523 = vmatpush1.msra.mxu0 0.0
        %1524 = vmatprep.subr.mxu0 0.0
        %1525 = vmatpush1.msra.mxu0 0.0
        %1526 = vmatprep.subr.mxu0 0.0
        %1527 = vmatpush1.msra.mxu0 0.0
        %1528 = vmatprep.subr.mxu0 0.0
        %1529 = vmatpush1.msra.mxu0 0.0
        %1530 = vmatprep.subr.mxu0 0.0
        %1531 = vmatpush1.msra.mxu0 0.0
        %1532 = vmatprep.subr.mxu0 0.0
        %1533 = vmatpush1.msra.mxu0 0.0
        %1534 = vmatprep.subr.mxu0 0.0
        %1535 = vmatpush1.msra.mxu0 0.0
        %1536 = vmatprep.subr.mxu0 0.0
        %1537 = vmatpush1.msra.mxu0 0.0
        %1538 = vmatprep.mubr.f32.mxu0 %v1275
        %1539 = vmatmul.mubr.f32.gmra.mrb[0].mxu0 %v1007
        %v1540 = vpop.f32.mrb[0].mxu0
        %v1541 = vadd.f32 %v1452, %v1540
        %v1542 = vpop.f32.mrb[0].mxu0
        %v1543 = vadd.f32 %v1454, %v1542
        %1544 = vmatprep.mubr.f32.mxu0 %v1278
        %1545 = vmatmul.mubr.f32.gmra.mrb[0].mxu0 %v1013
        %v1546 = vpop.f32.mrb[0].mxu0
        %v1547 = vadd.f32 %v1458, %v1546
        %v1548 = vpop.f32.mrb[0].mxu0
        %v1549 = vadd.f32 %v1460, %v1548
        %1550 = vmatprep.mubr.f32.mxu0 %v1281
        %1551 = vmatmul.mubr.f32.gmra.mrb[0].mxu0 %v1019
        %v1552 = vpop.f32.mrb[0].mxu0
        %v1553 = vadd.f32 %v1464, %v1552
        %v1554 = vpop.f32.mrb[0].mxu0
        %v1555 = vadd.f32 %v1466, %v1554
        %1556 = vmatprep.mubr.f32.mxu0 %v1284
        %1557 = vmatmul.mubr.f32.gmra.mrb[0].mxu0 %v1025
        %v1558 = vpop.f32.mrb[0].mxu0
        %v1559 = vadd.f32 %v1470, %v1558
        %v1560 = vpop.f32.mrb[0].mxu0
        %v1561 = vadd.f32 %v1472, %v1560
        %1562 = vdwg.mxu0
        %1563 = vmatprep.subr.mxu0 0.0
        %1564 = vmatpush1.msra.mxu0 %v1029
        %1565 = vmatprep.subr.mxu0 0.0
        %1566 = vmatpush1.msra.mxu0 %v1032
        %1567 = vmatprep.subr.mxu0 0.0
        %1568 = vmatpush1.msra.mxu0 %v1035
        %1569 = vmatprep.subr.mxu0 0.0
        %1570 = vmatpush1.msra.mxu0 %v1038
        %1571 = vmatprep.subr.mxu0 0.0
        %1572 = vmatpush1.msra.mxu0 %v1041
        %1573 = vmatprep.subr.mxu0 0.0
        %1574 = vmatpush1.msra.mxu0 %v1044
        %1575 = vmatprep.subr.mxu0 0.0
        %1576 = vmatpush1.msra.mxu0 %v1047
        %1577 = vmatprep.subr.mxu0 0.0
        %1578 = vmatpush1.msra.mxu0 %v1050
        %1579 = vmatprep.subr.mxu0 0.0
        %1580 = vmatpush1.msra.mxu0 %v1053
        %1581 = vmatprep.subr.mxu0 0.0
        %1582 = vmatpush1.msra.mxu0 %v1056
        %1583 = vmatprep.subr.mxu0 0.0
        %1584 = vmatpush1.msra.mxu0 %v1059
        %1585 = vmatprep.subr.mxu0 0.0
        %1586 = vmatpush1.msra.mxu0 %v1062
        %1587 = vmatprep.subr.mxu0 0.0
        %1588 = vmatpush1.msra.mxu0 %v1065
        %1589 = vmatprep.subr.mxu0 0.0
        %1590 = vmatpush1.msra.mxu0 %v1068
        %1591 = vmatprep.subr.mxu0 0.0
        %1592 = vmatpush1.msra.mxu0 %v1071
        %1593 = vmatprep.subr.mxu0 0.0
        %1594 = vmatpush1.msra.mxu0 %v1074
        %1595 = vmatprep.subr.mxu0 0.0
        %1596 = vmatpush1.msra.mxu0 %v1077
        %1597 = vmatprep.subr.mxu0 0.0
        %1598 = vmatpush1.msra.mxu0 %v1080
        %1599 = vmatprep.subr.mxu0 0.0
        %1600 = vmatpush1.msra.mxu0 %v1083
        %1601 = vmatprep.subr.mxu0 0.0
        %1602 = vmatpush1.msra.mxu0 %v1086
        %1603 = vmatprep.subr.mxu0 0.0
        %1604 = vmatpush1.msra.mxu0 %v1089
        %1605 = vmatprep.subr.mxu0 0.0
        %1606 = vmatpush1.msra.mxu0 %v1092
        %1607 = vmatprep.subr.mxu0 0.0
        %1608 = vmatpush1.msra.mxu0 %v1095
        %1609 = vmatprep.subr.mxu0 0.0
        %1610 = vmatpush1.msra.mxu0 %v1098
        %1611 = vmatprep.subr.mxu0 0.0
        %1612 = vmatpush1.msra.mxu0 %v1101
        %1613 = vmatprep.subr.mxu0 0.0
        %1614 = vmatpush1.msra.mxu0 %v1104
        %1615 = vmatprep.subr.mxu0 0.0
        %1616 = vmatpush1.msra.mxu0 %v1107
        %1617 = vmatprep.subr.mxu0 0.0
        %1618 = vmatpush1.msra.mxu0 %v1110
        %1619 = vmatprep.subr.mxu0 0.0
        %1620 = vmatpush1.msra.mxu0 %v1113
        %1621 = vmatprep.subr.mxu0 0.0
        %1622 = vmatpush1.msra.mxu0 %v1116
        %1623 = vmatprep.subr.mxu0 0.0
        %1624 = vmatpush1.msra.mxu0 %v1119
        %1625 = vmatprep.subr.mxu0 0.0
        %1626 = vmatpush1.msra.mxu0 %v1122
        %1627 = vmatprep.mubr.f32.mxu0 %v1004
        %1628 = vmatmul.mubr.f32.gmra.mrb[0].mxu0 %v1003
        %v1629 = vpop.f32.mrb[0].mxu0
        %v1630 = vadd.f32 0.0, %v1629
        %v1631 = vpop.f32.mrb[0].mxu0
        %1632 = vmatprep.mubr.f32.mxu0 %v1010
        %1633 = vmatmul.mubr.f32.gmra.mrb[0].mxu0 %v1009
        %v1634 = vpop.f32.mrb[0].mxu0
        %v1635 = vadd.f32 0.0, %v1634
        %v1636 = vpop.f32.mrb[0].mxu0
        %1637 = vmatprep.mubr.f32.mxu0 %v1016
        %1638 = vmatmul.mubr.f32.gmra.mrb[0].mxu0 %v1015
        %v1639 = vpop.f32.mrb[0].mxu0
        %v1640 = vadd.f32 0.0, %v1639
        %v1641 = vpop.f32.mrb[0].mxu0
        %1642 = vmatprep.mubr.f32.mxu0 %v1022
        %1643 = vmatmul.mubr.f32.gmra.mrb[0].mxu0 %v1021
        %v1644 = vpop.f32.mrb[0].mxu0
        %v1645 = vadd.f32 0.0, %v1644
        %v1646 = vpop.f32.mrb[0].mxu0
        %1647 = vdwg.mxu0
        %1648 = vmatprep.subr.mxu0 0.0
        %1649 = vmatpush1.msra.mxu0 %v1125
        %1650 = vmatprep.subr.mxu0 0.0
        %1651 = vmatpush1.msra.mxu0 %v1128
        %1652 = vmatprep.subr.mxu0 0.0
        %1653 = vmatpush1.msra.mxu0 %v1131
        %1654 = vmatprep.subr.mxu0 0.0
        %1655 = vmatpush1.msra.mxu0 %v1134
        %1656 = vmatprep.subr.mxu0 0.0
        %1657 = vmatpush1.msra.mxu0 %v1137
        %1658 = vmatprep.subr.mxu0 0.0
        %1659 = vmatpush1.msra.mxu0 %v1140
        %1660 = vmatprep.subr.mxu0 0.0
        %1661 = vmatpush1.msra.mxu0 %v1143
        %1662 = vmatprep.subr.mxu0 0.0
        %1663 = vmatpush1.msra.mxu0 %v1146
        %1664 = vmatprep.subr.mxu0 0.0
        %1665 = vmatpush1.msra.mxu0 %v1149
        %1666 = vmatprep.subr.mxu0 0.0
        %1667 = vmatpush1.msra.mxu0 %v1152
        %1668 = vmatprep.subr.mxu0 0.0
        %1669 = vmatpush1.msra.mxu0 %v1155
        %1670 = vmatprep.subr.mxu0 0.0
        %1671 = vmatpush1.msra.mxu0 %v1158
        %1672 = vmatprep.subr.mxu0 0.0
        %1673 = vmatpush1.msra.mxu0 %v1161
        %1674 = vmatprep.subr.mxu0 0.0
        %1675 = vmatpush1.msra.mxu0 %v1164
        %1676 = vmatprep.subr.mxu0 0.0
        %1677 = vmatpush1.msra.mxu0 %v1167
        %1678 = vmatprep.subr.mxu0 0.0
        %1679 = vmatpush1.msra.mxu0 %v1170
        %1680 = vmatprep.subr.mxu0 0.0
        %1681 = vmatpush1.msra.mxu0 %v1173
        %1682 = vmatprep.subr.mxu0 0.0
        %1683 = vmatpush1.msra.mxu0 %v1176
        %1684 = vmatprep.subr.mxu0 0.0
        %1685 = vmatpush1.msra.mxu0 %v1179
        %1686 = vmatprep.subr.mxu0 0.0
        %1687 = vmatpush1.msra.mxu0 %v1182
        %1688 = vmatprep.subr.mxu0 0.0
        %1689 = vmatpush1.msra.mxu0 %v1185
        %1690 = vmatprep.subr.mxu0 0.0
        %1691 = vmatpush1.msra.mxu0 %v1188
        %1692 = vmatprep.subr.mxu0 0.0
        %1693 = vmatpush1.msra.mxu0 %v1191
        %1694 = vmatprep.subr.mxu0 0.0
        %1695 = vmatpush1.msra.mxu0 %v1194
        %1696 = vmatprep.subr.mxu0 0.0
        %1697 = vmatpush1.msra.mxu0 %v1197
        %1698 = vmatprep.subr.mxu0 0.0
        %1699 = vmatpush1.msra.mxu0 %v1200
        %1700 = vmatprep.subr.mxu0 0.0
        %1701 = vmatpush1.msra.mxu0 %v1203
        %1702 = vmatprep.subr.mxu0 0.0
        %1703 = vmatpush1.msra.mxu0 %v1206
        %1704 = vmatprep.subr.mxu0 0.0
        %1705 = vmatpush1.msra.mxu0 %v1209
        %1706 = vmatprep.subr.mxu0 0.0
        %1707 = vmatpush1.msra.mxu0 %v1212
        %1708 = vmatprep.subr.mxu0 0.0
        %1709 = vmatpush1.msra.mxu0 %v1215
        %1710 = vmatprep.subr.mxu0 0.0
        %1711 = vmatpush1.msra.mxu0 %v1218
        %1712 = vmatprep.mubr.f32.mxu0 %v1006
        %1713 = vmatmul.mubr.f32.gmra.mrb[0].mxu0 %v1005
        %v1714 = vpop.f32.mrb[0].mxu0
        %v1715 = vadd.f32 %v1630, %v1714
        %v1716 = vpop.f32.mrb[0].mxu0
        %1717 = vmatprep.mubr.f32.mxu0 %v1012
        %1718 = vmatmul.mubr.f32.gmra.mrb[0].mxu0 %v1011
        %v1719 = vpop.f32.mrb[0].mxu0
        %v1720 = vadd.f32 %v1635, %v1719
        %v1721 = vpop.f32.mrb[0].mxu0
        %1722 = vmatprep.mubr.f32.mxu0 %v1018
        %1723 = vmatmul.mubr.f32.gmra.mrb[0].mxu0 %v1017
        %v1724 = vpop.f32.mrb[0].mxu0
        %v1725 = vadd.f32 %v1640, %v1724
        %v1726 = vpop.f32.mrb[0].mxu0
        %1727 = vmatprep.mubr.f32.mxu0 %v1024
        %1728 = vmatmul.mubr.f32.gmra.mrb[0].mxu0 %v1023
        %v1729 = vpop.f32.mrb[0].mxu0
        %v1730 = vadd.f32 %v1645, %v1729
        %v1731 = vpop.f32.mrb[0].mxu0
        %1732 = vdwg.mxu0
        %1733 = vmatprep.subr.mxu0 0.0
        %1734 = vmatpush1.msra.mxu0 %v1221
        %1735 = vmatprep.subr.mxu0 0.0
        %1736 = vmatpush1.msra.mxu0 %v1224
        %1737 = vmatprep.subr.mxu0 0.0
        %1738 = vmatpush1.msra.mxu0 %v1227
        %1739 = vmatprep.subr.mxu0 0.0
        %1740 = vmatpush1.msra.mxu0 %v1230
        %1741 = vmatprep.subr.mxu0 0.0
        %1742 = vmatpush1.msra.mxu0 %v1233
        %1743 = vmatprep.subr.mxu0 0.0
        %1744 = vmatpush1.msra.mxu0 %v1236
        %1745 = vmatprep.subr.mxu0 0.0
        %1746 = vmatpush1.msra.mxu0 %v1239
        %1747 = vmatprep.subr.mxu0 0.0
        %1748 = vmatpush1.msra.mxu0 %v1242
        %1749 = vmatprep.subr.mxu0 0.0
        %1750 = vmatpush1.msra.mxu0 %v1245
        %1751 = vmatprep.subr.mxu0 0.0
        %1752 = vmatpush1.msra.mxu0 %v1248
        %1753 = vmatprep.subr.mxu0 0.0
        %1754 = vmatpush1.msra.mxu0 %v1251
        %1755 = vmatprep.subr.mxu0 0.0
        %1756 = vmatpush1.msra.mxu0 %v1254
        %1757 = vmatprep.subr.mxu0 0.0
        %1758 = vmatpush1.msra.mxu0 %v1257
        %1759 = vmatprep.subr.mxu0 0.0
        %1760 = vmatpush1.msra.mxu0 %v1260
        %1761 = vmatprep.subr.mxu0 0.0
        %1762 = vmatpush1.msra.mxu0 %v1263
        %1763 = vmatprep.subr.mxu0 0.0
        %1764 = vmatpush1.msra.mxu0 %v1266
        %1765 = vmatprep.subr.mxu0 0.0
        %1766 = vmatpush1.msra.mxu0 %v1269
        %1767 = vmatprep.subr.mxu0 0.0
        %1768 = vmatpush1.msra.mxu0 %v1294
        %1769 = vmatprep.subr.mxu0 0.0
        %1770 = vmatpush1.msra.mxu0 0.0
        %1771 = vmatprep.subr.mxu0 0.0
        %1772 = vmatpush1.msra.mxu0 0.0
        %1773 = vmatprep.subr.mxu0 0.0
        %1774 = vmatpush1.msra.mxu0 0.0
        %1775 = vmatprep.subr.mxu0 0.0
        %1776 = vmatpush1.msra.mxu0 0.0
        %1777 = vmatprep.subr.mxu0 0.0
        %1778 = vmatpush1.msra.mxu0 0.0
        %1779 = vmatprep.subr.mxu0 0.0
        %1780 = vmatpush1.msra.mxu0 0.0
        %1781 = vmatprep.subr.mxu0 0.0
        %1782 = vmatpush1.msra.mxu0 0.0
        %1783 = vmatprep.subr.mxu0 0.0
        %1784 = vmatpush1.msra.mxu0 0.0
        %1785 = vmatprep.subr.mxu0 0.0
        %1786 = vmatpush1.msra.mxu0 0.0
        %1787 = vmatprep.subr.mxu0 0.0
        %1788 = vmatpush1.msra.mxu0 0.0
        %1789 = vmatprep.subr.mxu0 0.0
        %1790 = vmatpush1.msra.mxu0 0.0
        %1791 = vmatprep.subr.mxu0 0.0
        %1792 = vmatpush1.msra.mxu0 0.0
        %1793 = vmatprep.subr.mxu0 0.0
        %1794 = vmatpush1.msra.mxu0 0.0
        %1795 = vmatprep.subr.mxu0 0.0
        %1796 = vmatpush1.msra.mxu0 0.0
        %1797 = vmatprep.mubr.f32.mxu0 %v1275
        %1798 = vmatmul.mubr.f32.gmra.mrb[0].mxu0 %v1007
        %v1799 = vpop.f32.mrb[0].mxu0
        %v1800 = vadd.f32 %v1715, %v1799
        %v1801 = vpop.f32.mrb[0].mxu0
        %1802 = vmatprep.mubr.f32.mxu0 %v1278
        %1803 = vmatmul.mubr.f32.gmra.mrb[0].mxu0 %v1013
        %v1804 = vpop.f32.mrb[0].mxu0
        %v1805 = vadd.f32 %v1720, %v1804
        %v1806 = vpop.f32.mrb[0].mxu0
        %1807 = vmatprep.mubr.f32.mxu0 %v1281
        %1808 = vmatmul.mubr.f32.gmra.mrb[0].mxu0 %v1019
        %v1809 = vpop.f32.mrb[0].mxu0
        %v1810 = vadd.f32 %v1725, %v1809
        %v1811 = vpop.f32.mrb[0].mxu0
        %1812 = vmatprep.mubr.f32.mxu0 %v1284
        %1813 = vmatmul.mubr.f32.gmra.mrb[0].mxu0 %v1025
        %v1814 = vpop.f32.mrb[0].mxu0
        %v1815 = vadd.f32 %v1730, %v1814
        %v1816 = vpop.f32.mrb[0].mxu0
        %1817 = vdwg.mxu0
        %v1818 = vld [vmem:[%s5] sm:$0xff]
        %v1819 = vld [vmem:[%s5 + $0x8] sm:$0xff]
        %v1820 = vld [vmem:[%s5 + $0x10] sm:$0xff]
        %v1821 = vld [vmem:[%s5 + $0x18] sm:$0xff]
        %v1822 = vld [vmem:[%s5 + $0x20] sm:$0xff]
        %v1823 = vld [vmem:[%s5 + $0x28] sm:$0xff]
        %v1824 = vld [vmem:[%s5 + $0x30] sm:$0xff]
        %v1825 = vld [vmem:[%s5 + $0x38] sm:$0xff]
        %v1826 = vld [vmem:[%s5 + $0x40] sm:$0xff]
        %v1827 = vld [vmem:[%s5 + $0x48] sm:$0xff]
        %v1828 = vld [vmem:[%s5 + $0x50] sm:$0xff]
        %v1829 = vld [vmem:[%s5 + $0x58] sm:$0xff]
        %v1830 = vmul.f32 %v1541, %v1818
        %v1831 = vmul.f32 %v1543, %v1819
        %v1832 = vmul.f32 %v1800, %v1820
        %v1833 = vmul.f32 %v1547, %v1821
        %v1834 = vmul.f32 %v1549, %v1822
        %v1835 = vmul.f32 %v1805, %v1823
        %v1836 = vmul.f32 %v1553, %v1824
        %v1837 = vmul.f32 %v1555, %v1825
        %v1838 = vmul.f32 %v1810, %v1826
        %v1839 = vmul.f32 %v1559, %v1827
        %v1840 = vmul.f32 %v1561, %v1828
        %v1841 = vmul.f32 %v1815, %v1829
        %v1842 = vld [vmem:[%s6] sm:$0xff]
        %v1843 = vld [vmem:[%s6 + $0x8] sm:$0xff]
        %v1844 = vld [vmem:[%s6 + $0x10] sm:$0xff]
        %v1845 = vld [vmem:[%s6 + $0x18] sm:$0xff]
        %v1846 = vld [vmem:[%s6 + $0x20] sm:$0xff]
        %v1847 = vld [vmem:[%s6 + $0x28] sm:$0xff]
        %v1848 = vld [vmem:[%s6 + $0x30] sm:$0xff]
        %v1849 = vld [vmem:[%s6 + $0x38] sm:$0xff]
        %v1850 = vld [vmem:[%s6 + $0x40] sm:$0xff]
        %v1851 = vld [vmem:[%s6 + $0x48] sm:$0xff]
        %v1852 = vld [vmem:[%s6 + $0x50] sm:$0xff]
        %v1853 = vld [vmem:[%s6 + $0x58] sm:$0xff]
        %v1854 = vld [vmem:[%s6 + $0x60] sm:$0xff]
        %v1855 = vld [vmem:[%s6 + $0x68] sm:$0xff]
        %v1856 = vld [vmem:[%s6 + $0x70] sm:$0xff]
        %v1857 = vld [vmem:[%s6 + $0x78] sm:$0xff]
        %v1858 = vld [vmem:[%s6 + $0x80] sm:$0xff]
        %v1859 = vld [vmem:[%s6 + $0x88] sm:$0xff]
        %v1860 = vld [vmem:[%s6 + $0x90] sm:$0xff]
        %v1861 = vld [vmem:[%s6 + $0x98] sm:$0xff]
        %v1862 = vld [vmem:[%s6 + $0xa0] sm:$0xff]
        %v1863 = vld [vmem:[%s6 + $0xa8] sm:$0xff]
        %v1864 = vld [vmem:[%s6 + $0xb0] sm:$0xff]
        %v1865 = vld [vmem:[%s6 + $0xb8] sm:$0xff]
        %v1866 = vld [vmem:[%s6 + $0xc0] sm:$0xff]
        %v1867 = vld [vmem:[%s6 + $0xc8] sm:$0xff]
        %v1868 = vld [vmem:[%s6 + $0xd0] sm:$0xff]
        %v1869 = vld [vmem:[%s6 + $0xd8] sm:$0xff]
        %v1870 = vld [vmem:[%s6 + $0xe0] sm:$0xff]
        %v1871 = vld [vmem:[%s6 + $0xe8] sm:$0xff]
        %v1872 = vld [vmem:[%s6 + $0xf0] sm:$0xff]
        %v1873 = vld [vmem:[%s6 + $0xf8] sm:$0xff]
        %v1874 = vld [vmem:[%s6 + $0x100] sm:$0xff]
        %v1875 = vld [vmem:[%s6 + $0x108] sm:$0xff]
        %v1876 = vld [vmem:[%s6 + $0x110] sm:$0xff]
        %v1877 = vld [vmem:[%s6 + $0x118] sm:$0xff]
        %v1878 = vld [vmem:[%s6 + $0x120] sm:$0xff]
        %v1879 = vld [vmem:[%s6 + $0x128] sm:$0xff]
        %v1880 = vld [vmem:[%s6 + $0x130] sm:$0xff]
        %v1881 = vld [vmem:[%s6 + $0x138] sm:$0xff]
        %vm1882 = vcmask 523264
        %v1884 = vsel %vm1882, %v1832, 0
        %v1887 = vsel %vm1882, %v1835, 0
        %v1890 = vsel %vm1882, %v1838, 0
        %v1893 = vsel %vm1882, %v1841, 0
        %1895 = vmatprep.subr.mxu0 0.0
        %1896 = vmatpush1.msra.mxu0 %v1842
        %1897 = vmatprep.subr.mxu0 0.0
        %1898 = vmatpush1.msra.mxu0 %v1843
        %1899 = vmatprep.subr.mxu0 0.0
        %1900 = vmatpush1.msra.mxu0 %v1844
        %1901 = vmatprep.subr.mxu0 0.0
        %1902 = vmatpush1.msra.mxu0 %v1845
        %1903 = vmatprep.subr.mxu0 0.0
        %1904 = vmatpush1.msra.mxu0 %v1846
        %1905 = vmatprep.subr.mxu0 0.0
        %1906 = vmatpush1.msra.mxu0 %v1847
        %1907 = vmatprep.subr.mxu0 0.0
        %1908 = vmatpush1.msra.mxu0 %v1848
        %1909 = vmatprep.subr.mxu0 0.0
        %1910 = vmatpush1.msra.mxu0 %v1849
        %1911 = vmatprep.subr.mxu0 0.0
        %1912 = vmatpush1.msra.mxu0 %v1850
        %1913 = vmatprep.subr.mxu0 0.0
        %1914 = vmatpush1.msra.mxu0 %v1851
        %1915 = vmatprep.subr.mxu0 0.0
        %1916 = vmatpush1.msra.mxu0 %v1852
        %1917 = vmatprep.subr.mxu0 0.0
        %1918 = vmatpush1.msra.mxu0 %v1853
        %1919 = vmatprep.subr.mxu0 0.0
        %1920 = vmatpush1.msra.mxu0 %v1854
        %1921 = vmatprep.subr.mxu0 0.0
        %1922 = vmatpush1.msra.mxu0 %v1855
        %1923 = vmatprep.subr.mxu0 0.0
        %1924 = vmatpush1.msra.mxu0 %v1856
        %1925 = vmatprep.subr.mxu0 0.0
        %1926 = vmatpush1.msra.mxu0 %v1857
        %1927 = vmatprep.subr.mxu0 0.0
        %1928 = vmatpush1.msra.mxu0 %v1858
        %1929 = vmatprep.subr.mxu0 0.0
        %1930 = vmatpush1.msra.mxu0 %v1859
        %1931 = vmatprep.subr.mxu0 0.0
        %1932 = vmatpush1.msra.mxu0 %v1860
        %1933 = vmatprep.subr.mxu0 0.0
        %1934 = vmatpush1.msra.mxu0 %v1861
        %1935 = vmatprep.subr.mxu0 0.0
        %1936 = vmatpush1.msra.mxu0 %v1862
        %1937 = vmatprep.subr.mxu0 0.0
        %1938 = vmatpush1.msra.mxu0 %v1863
        %1939 = vmatprep.subr.mxu0 0.0
        %1940 = vmatpush1.msra.mxu0 %v1864
        %1941 = vmatprep.subr.mxu0 0.0
        %1942 = vmatpush1.msra.mxu0 %v1865
        %1943 = vmatprep.subr.mxu0 0.0
        %1944 = vmatpush1.msra.mxu0 %v1866
        %1945 = vmatprep.subr.mxu0 0.0
        %1946 = vmatpush1.msra.mxu0 %v1867
        %1947 = vmatprep.subr.mxu0 0.0
        %1948 = vmatpush1.msra.mxu0 %v1868
        %1949 = vmatprep.subr.mxu0 0.0
        %1950 = vmatpush1.msra.mxu0 %v1869
        %1951 = vmatprep.subr.mxu0 0.0
        %1952 = vmatpush1.msra.mxu0 %v1870
        %1953 = vmatprep.subr.mxu0 0.0
        %1954 = vmatpush1.msra.mxu0 %v1871
        %1955 = vmatprep.subr.mxu0 0.0
        %1956 = vmatpush1.msra.mxu0 %v1872
        %1957 = vmatprep.subr.mxu0 0.0
        %1958 = vmatpush1.msra.mxu0 %v1873
        %1959 = vmatprep.mubr.f32.mxu0 %v1831
        %1960 = vmatmul.mubr.f32.gmra.mrb[0].mxu0 %v1830
        %v1961 = vpop.f32.mrb[0].mxu0
        %v1962 = vadd.f32 0.0, %v1961
        %v1963 = vpop.f32.mrb[0].mxu0
        %1964 = vmatprep.mubr.f32.mxu0 %v1834
        %1965 = vmatmul.mubr.f32.gmra.mrb[0].mxu0 %v1833
        %v1966 = vpop.f32.mrb[0].mxu0
        %v1967 = vadd.f32 0.0, %v1966
        %v1968 = vpop.f32.mrb[0].mxu0
        %1969 = vmatprep.mubr.f32.mxu0 %v1837
        %1970 = vmatmul.mubr.f32.gmra.mrb[0].mxu0 %v1836
        %v1971 = vpop.f32.mrb[0].mxu0
        %v1972 = vadd.f32 0.0, %v1971
        %v1973 = vpop.f32.mrb[0].mxu0
        %1974 = vmatprep.mubr.f32.mxu0 %v1840
        %1975 = vmatmul.mubr.f32.gmra.mrb[0].mxu0 %v1839
        %v1976 = vpop.f32.mrb[0].mxu0
        %v1977 = vadd.f32 0.0, %v1976
        %v1978 = vpop.f32.mrb[0].mxu0
        %1979 = vdwg.mxu0
        %1980 = vmatprep.subr.mxu0 0.0
        %1981 = vmatpush1.msra.mxu0 %v1874
        %1982 = vmatprep.subr.mxu0 0.0
        %1983 = vmatpush1.msra.mxu0 %v1875
        %1984 = vmatprep.subr.mxu0 0.0
        %1985 = vmatpush1.msra.mxu0 %v1876
        %1986 = vmatprep.subr.mxu0 0.0
        %1987 = vmatpush1.msra.mxu0 %v1877
        %1988 = vmatprep.subr.mxu0 0.0
        %1989 = vmatpush1.msra.mxu0 %v1878
        %1990 = vmatprep.subr.mxu0 0.0
        %1991 = vmatpush1.msra.mxu0 %v1879
        %1992 = vmatprep.subr.mxu0 0.0
        %1993 = vmatpush1.msra.mxu0 %v1880
        %1994 = vmatprep.subr.mxu0 0.0
        %1995 = vmatpush1.msra.mxu0 %v1881
        %1996 = vmatprep.subr.mxu0 0.0
        %1997 = vmatpush1.msra.mxu0 0.0
        %1998 = vmatprep.subr.mxu0 0.0
        %1999 = vmatpush1.msra.mxu0 0.0
        %2000 = vmatprep.subr.mxu0 0.0
        %2001 = vmatpush1.msra.mxu0 0.0
        %2002 = vmatprep.subr.mxu0 0.0
        %2003 = vmatpush1.msra.mxu0 0.0
        %2004 = vmatprep.subr.mxu0 0.0
        %2005 = vmatpush1.msra.mxu0 0.0
        %2006 = vmatprep.subr.mxu0 0.0
        %2007 = vmatpush1.msra.mxu0 0.0
        %2008 = vmatprep.subr.mxu0 0.0
        %2009 = vmatpush1.msra.mxu0 0.0
        %2010 = vmatprep.subr.mxu0 0.0
        %2011 = vmatpush1.msra.mxu0 0.0
        %2012 = vmatprep.subr.mxu0 0.0
        %2013 = vmatpush1.msra.mxu0 0.0
        %2014 = vmatprep.subr.mxu0 0.0
        %2015 = vmatpush1.msra.mxu0 0.0
        %2016 = vmatprep.subr.mxu0 0.0
        %2017 = vmatpush1.msra.mxu0 0.0
        %2018 = vmatprep.subr.mxu0 0.0
        %2019 = vmatpush1.msra.mxu0 0.0
        %2020 = vmatprep.subr.mxu0 0.0
        %2021 = vmatpush1.msra.mxu0 0.0
        %2022 = vmatprep.subr.mxu0 0.0
        %2023 = vmatpush1.msra.mxu0 0.0
        %2024 = vmatprep.subr.mxu0 0.0
        %2025 = vmatpush1.msra.mxu0 0.0
        %2026 = vmatprep.subr.mxu0 0.0
        %2027 = vmatpush1.msra.mxu0 0.0
        %2028 = vmatprep.subr.mxu0 0.0
        %2029 = vmatpush1.msra.mxu0 0.0
        %2030 = vmatprep.subr.mxu0 0.0
        %2031 = vmatpush1.msra.mxu0 0.0
        %2032 = vmatprep.subr.mxu0 0.0
        %2033 = vmatpush1.msra.mxu0 0.0
        %2034 = vmatprep.subr.mxu0 0.0
        %2035 = vmatpush1.msra.mxu0 0.0
        %2036 = vmatprep.subr.mxu0 0.0
        %2037 = vmatpush1.msra.mxu0 0.0
        %2038 = vmatprep.subr.mxu0 0.0
        %2039 = vmatpush1.msra.mxu0 0.0
        %2040 = vmatprep.subr.mxu0 0.0
        %2041 = vmatpush1.msra.mxu0 0.0
        %2042 = vmatprep.subr.mxu0 0.0
        %2043 = vmatpush1.msra.mxu0 0.0
        %2044 = vmatprep.mubr.f32.mxu0 0.0
        %2045 = vmatmul.mubr.f32.gmra.mrb[0].mxu0 %v1884
        %v2046 = vpop.f32.mrb[0].mxu0
        %v2047 = vadd.f32 %v1962, %v2046
        %v2048 = vpop.f32.mrb[0].mxu0
        %2049 = vmatprep.mubr.f32.mxu0 0.0
        %2050 = vmatmul.mubr.f32.gmra.mrb[0].mxu0 %v1887
        %v2051 = vpop.f32.mrb[0].mxu0
        %v2052 = vadd.f32 %v1967, %v2051
        %v2053 = vpop.f32.mrb[0].mxu0
        %2054 = vmatprep.mubr.f32.mxu0 0.0
        %2055 = vmatmul.mubr.f32.gmra.mrb[0].mxu0 %v1890
        %v2056 = vpop.f32.mrb[0].mxu0
        %v2057 = vadd.f32 %v1972, %v2056
        %v2058 = vpop.f32.mrb[0].mxu0
        %2059 = vmatprep.mubr.f32.mxu0 0.0
        %2060 = vmatmul.mubr.f32.gmra.mrb[0].mxu0 %v1893
        %v2061 = vpop.f32.mrb[0].mxu0
        %v2062 = vadd.f32 %v1977, %v2061
        %v2063 = vpop.f32.mrb[0].mxu0
        %2064 = vdwg.mxu0
        %vm2065 = vcmask 80896
        %v2066 = vsel %vm2065, %v2047, 0.0
        %v2067 = vsel %vm2065, %v2052, 0.0
        %v2068 = vadd.f32 %v2066, %v2067
        %v2069 = vsel %vm2065, %v2057, 0.0
        %v2070 = vadd.f32 %v2068, %v2069
        %v2071 = vsel %vm2065, %v2062, 0.0
        %v2072 = vadd.f32 %v2070, %v2071
        %v2073 = vrot.slane %v2072, 4
        %v2074 = vadd.f32 %v2072, %v2073
        %v2075 = vrot.slane %v2074, 2
        %v2076 = vadd.f32 %v2074, %v2075
        %v2077 = vrot.slane %v2076, 1
        %v2078 = vadd.f32 %v2076, %v2077
        %v2079 = vld [vmem:[%s4] sm:$0x1]
        %v2080 = vadd.f32 %v2078, %v2079
        %vm2081 = vcmask 73728
        %v2082 = vsel %vm2081, %v2080, -inf
        %2083 = vmax.xlane.f32.xlu0 %v2082
        %v2084 = vpop.xlane.xlu0 %2083
        %v2085 = vsub.f32 %v2080, %v2084
        %v2086 = vmul.f32 %v2085, 1.442695
        %v2087 = vpow.pop %v2086
        %v2088 = vsel %vm2081, %v2087, 0.0
        %2089 = vadd.xlane.f32.xlu0 %v2088
        %v2090 = vpop.xlane.xlu0 %2089
        %v2091 = vrcp.pop %v2090
        %v2092 = vmul.f32 %v2087, %v2091
        %2093 = vst.msk [vmem:[%s270] sm:$0x1] %vm2081, %v2092
        %s2094 = sand.u32 %s181, 1
        %s2095 = scalar_lea.sflag [#allocation3], %s2094
        %s2096 = sand.u32 %s181, 1
        %s2097 = scalar_lea.vmem [#allocation2], %s2096
        // Predicated region
        $region49: #{vanilla_cnn_forward.1} parent=47 // pred_check
          %p2098 = pneg %p191
        $region50: #{vanilla_cnn_forward.1} parent=47 // pred_check_branch
          %2100 = sbr.rel (%p2098) target = $region52
        $region51: #{vanilla_cnn_forward.1} parent=47 // pred_region
          %s2102 = ssub.s32 16, 16
          %2103 = vsyncadd %s2095, %s2102
          %s2104 = smul.addr %s21, 16
          %s2105 = scalar_lea.hbm %s7, %s2104
          %s2107 = sshll.u32 %s2097, 4
          %s2108 = int_to_ptr.vmem [resolvable:$true] %s2107
          %2110 = dma.vmem_to_hbm [thread:$0]  %s2108, 16, %s2105, %s2095
        $region52: #{vanilla_cnn_forward.1} parent=47 // pred_fallthru
          _
      $region48: #{vanilla_cnn_forward.1} parent=5 // pred_fallthru
        _
      %p2111 = scmp.le.s32.totalorder 2, %s16
      // Predicated region
      $region53: #{vanilla_cnn_forward.1} parent=5 // pred_check
        %p2112 = pneg %p2111
      $region54: #{vanilla_cnn_forward.1} parent=5 // pred_check_branch
        %2114 = sbr.rel (%p2112) target = $region56
      $region55: #{vanilla_cnn_forward.1} parent=5 // pred_region
        %s2115 = ssub.s32 %s16, 2
        // Predicated region
        $region57: #{vanilla_cnn_forward.1} parent=55 // pred_check
          %p2116 = pneg %p197
        $region58: #{vanilla_cnn_forward.1} parent=55 // pred_check_branch
          %2118 = sbr.rel (%p2116) target = $region60
        $region59: #{vanilla_cnn_forward.1} parent=55 // pred_region
          %s2119 = sand.u32 %s182, 1
          %s2120 = scalar_lea.sflag [#allocation3], %s2119
          %s2121 = sand.u32 %s182, 1
          %s2122 = scalar_lea.vmem [#allocation2], %s2121
          %2123 = dma.done %s2120, 16
        $region60: #{vanilla_cnn_forward.1} parent=55 // pred_fallthru
          _
      $region56: #{vanilla_cnn_forward.1} parent=5 // pred_fallthru
        _
    $region6: #{vanilla_cnn_forward.1} parent=1 // loop_footer
      %s20 = sadd.s32 1, %s16
    $region7: #{vanilla_cnn_forward.1} parent=1 // loop_footer_branch
      %15 = sbr.rel target = $region3
    $region8: #{vanilla_cnn_forward.1} parent=1 // loop_exit
      _
    %2124 = vsyncpa [#allocation3], 1
    %s2125 = scalar_lea.sflag [#allocation3], 1
    %2126 = vsyncpa %s2125, 1

</llo_original>
